<compile_context>
chip_gen: v7x
topology: tpu7x:2x2x1
jax: 0.10.0
libtpu: 0.0.40
codegen_flags: <defaults>
</compile_context>

<pallas_src>
import jax
import jax.numpy as jnp
from jax.experimental import pallas as pl
from jax.experimental.pallas import tpu as pltpu


def _cae_fused_kernel(p1_ref, w1_ref, b1_ref, w2_ref, b2_ref, w3_ref, b3_ref,
                      o_ref):
    """Fused 3x (2x2/s2 conv-as-matmul + bias + ReLU) for one batch block.

    p1_ref : [1, M1b, 8]   f32   layer-1 patches (K padded 4->8), rows ordered
                                 (kh2,kw2,kh3,kw3, b, ho3, wo3) -- see wrapper
    w1_ref : [8,   C1]     bf16  b1_ref : [1, C1]  f32
    w2_ref : [4*C1, C2]    bf16  b2_ref : [1, C2]  f32
    w3_ref : [4*C2, C3]    bf16  b3_ref : [1, C3]  f32
    o_ref  : [1, M3b, C3]  f32   (M1b = 4*M2b, M2b = 4*M3b)
    """
    # ---- Layer 1: K=8 matmul on the (otherwise idle) MXU. ----
    p1 = p1_ref[0].astype(jnp.bfloat16)                         # [M1b, 8]
    acc1 = jnp.dot(p1, w1_ref[...], preferred_element_type=jnp.float32)
    # bf16 cast at the ReLU so the concat below builds p2 directly in bf16.
    a1 = jnp.maximum(acc1 + b1_ref[...], 0.0).astype(jnp.bfloat16)  # [M1b, C1]

    # ---- Layer 2: space-to-depth == row slices + lane concat, then MXU. ----
    m1 = a1.shape[0]
    m2 = m1 // 4
    p2 = jnp.concatenate(
        [a1[0 * m2:1 * m2], a1[1 * m2:2 * m2],
         a1[2 * m2:3 * m2], a1[3 * m2:4 * m2]], axis=-1)        # [M2b, 4*C1] bf16
    acc2 = jnp.dot(p2, w2_ref[...], preferred_element_type=jnp.float32)
    a2 = jnp.maximum(acc2 + b2_ref[...], 0.0).astype(jnp.bfloat16)  # [M2b, C2]

    # ---- Layer 3 ----
    m3 = m2 // 4
    p3 = jnp.concatenate(
        [a2[0 * m3:1 * m3], a2[1 * m3:2 * m3],
         a2[2 * m3:3 * m3], a2[3 * m3:4 * m3]], axis=-1)        # [M3b, 4*C2] bf16
    acc3 = jnp.dot(p3, w3_ref[...], preferred_element_type=jnp.float32)
    a3 = jnp.maximum(acc3 + b3_ref[...], 0.0)                   # [M3b, C3] f32

    o_ref[0] = a3.astype(o_ref.dtype)


def prepare_params(raw_params):
    """One-time weight prep (static; do NOT call per forward).

    PyTorch conv weights [Cout, Cin, 2, 2] -> matmul weights [(kh,kw,cin), Cout].
    MXU weights are pre-cast to bf16 (layer-1 weight zero-padded along K from
    4 to 8 rows); biases stay f32 (f32 bias+ReLU epilogue on every chip gen).
    """
    (w1, b1), (w2, b2), (w3, b3) = raw_params

    def mat(w):
        co, ci, kh, kw = w.shape
        return w.transpose(2, 3, 1, 0).reshape(kh * kw * ci, co)

    w1m = jnp.pad(mat(w1), ((0, 4), (0, 0)))        # [8, C1], zero K-padding
    return (
        (w1m.astype(jnp.bfloat16), b1.reshape(1, -1).astype(jnp.float32)),
        (mat(w2).astype(jnp.bfloat16), b2.reshape(1, -1).astype(jnp.float32)),
        (mat(w3).astype(jnp.bfloat16), b3.reshape(1, -1).astype(jnp.float32)),
    )


def _vmem_bytes_per_step(b_blk, m3_img, c1, c2, c3):
    """Rough per-grid-step VMEM footprint (bytes) for batch block b_blk."""
    m3 = b_blk * m3_img
    m2 = 4 * m3
    m1 = 16 * m3
    bytes_ = 0
    bytes_ += 2 * m1 * 128 * 4          # p1 block, lane-padded to 128, 2x buffered
    bytes_ += m1 * c1 * (4 + 2)         # acc1 f32 + a1 bf16
    bytes_ += m2 * 4 * c1 * 2           # p2 bf16
    bytes_ += m2 * c2 * (4 + 2)         # acc2 f32 + a2 bf16
    bytes_ += m3 * 4 * c2 * 2           # p3 bf16
    bytes_ += m3 * c3 * 4               # acc3 f32
    bytes_ += 2 * m3 * c3 * 4           # output block, double-buffered
    bytes_ += (8 * c1 + 4 * c1 * c2 + 4 * c2 * c3) * 2   # resident bf16 weights
    bytes_ += (c1 + c2 + c3) * 4                          # biases
    return bytes_


def _choose_batch_block(n, m3_img, c1, c2, c3,
                        budget_bytes=28 << 20, target_rows=512):
    """Smallest divisor of n reaching `target_rows` layer-3 rows within the
    VMEM budget; otherwise the largest divisor that fits the budget."""
    best = 1
    for d in range(1, n + 1):
        if n % d:
            continue
        if _vmem_bytes_per_step(d, m3_img, c1, c2, c3) > budget_bytes:
            break
        best = d
        if d * m3_img >= target_rows:
            break
    return best


def cae_forward(x_nchw, params, batch_block=None):
    """Eval-mode forward of CAutoEncoder. x: [N, 1, H, W] -> [N, 512, Ho3, Wo3]."""
    (w1m, b1m), (w2m, b2m), (w3m, b3m) = params
    N, cin, H, W = x_nchw.shape
    assert cin == 1, "CAutoEncoder's first conv expects a single input channel"
    C1, C2, C3 = w1m.shape[1], w2m.shape[1], w3m.shape[1]

    pad = 2
    Hp, Wp = H + 2 * pad, W + 2 * pad
    Ho3, Wo3 = (Hp // 2) // 2 // 2, (Wp // 2) // 2 // 2   # final spatial size
    assert Ho3 >= 1 and Wo3 >= 1, "input too small for three stride-2 convs"
    M3_img = Ho3 * Wo3                                    # per-image layer-3 rows

    # ---- batch folding: B_blk images share one grid step's row axis. ----
    B_blk = batch_block if batch_block is not None else _choose_batch_block(
        N, M3_img, C1, C2, C3)
    assert N % B_blk == 0
    G = N // B_blk
    M3b = B_blk * M3_img
    M1b = 16 * M3b

    # Zero-pad (PyTorch Conv2d padding) and crop to the receptive field of the
    # final output; trailing rows/cols the strided windows never reach do not
    # influence y, so dropping them is exact.
    xp = jnp.pad(x_nchw[:, 0], ((0, 0), (pad, pad), (pad, pad)))
    xc = xp[:, :8 * Ho3, :8 * Wo3]

    # Single host-side restructuring of the (tiny) input: simultaneously the
    # layer-1 space-to-depth and the Morton-style row ordering (with the batch
    # index folded in) that lets the kernel regroup layer-2/3 patches with
    # static slices + lane concat.
    #   pixel row = 8*ho3 + 4*kh3 + 2*kh2 + kh1   (same for columns)
    xr = xc.reshape(G, B_blk, Ho3, 2, 2, 2, Wo3, 2, 2, 2)
    #     axes:     0    1    2   3  4  5   6    7  8  9
    #              (g,   b,  ho3,kh3,kh2,kh1,wo3,kw3,kw2,kw1)
    # target row order: (kh2, kw2, kh3, kw3, b, ho3, wo3); cols (kh1, kw1)
    patches1 = xr.transpose(0, 4, 8, 3, 7, 1, 2, 6, 5, 9).reshape(G, M1b, 4)
    patches1 = jnp.pad(patches1, ((0, 0), (0, 0), (0, 4)))     # K: 4 -> 8

    vmem_limit = min(48 << 20,
                     max(32 << 20,
                         int(1.5 * _vmem_bytes_per_step(B_blk, M3_img,
                                                        C1, C2, C3))))

    out = pl.pallas_call(
        _cae_fused_kernel,
        out_shape=jax.ShapeDtypeStruct((G, M3b, C3), jnp.float32),
        grid=(G,),
        in_specs=[
            pl.BlockSpec((1, M1b, 8), lambda g: (g, 0, 0)),
            pl.BlockSpec((8, C1), lambda g: (0, 0)),
            pl.BlockSpec((1, C1), lambda g: (0, 0)),
            pl.BlockSpec((4 * C1, C2), lambda g: (0, 0)),
            pl.BlockSpec((1, C2), lambda g: (0, 0)),
            pl.BlockSpec((4 * C2, C3), lambda g: (0, 0)),
            pl.BlockSpec((1, C3), lambda g: (0, 0)),
        ],
        out_specs=pl.BlockSpec((1, M3b, C3), lambda g: (g, 0, 0)),
        compiler_params=pltpu.CompilerParams(
            dimension_semantics=("parallel",),
            vmem_limit_bytes=vmem_limit),
    )(patches1, w1m, b1m, w2m, b2m, w3m, b3m)

    # Rows within a block are ordered (b, ho3, wo3); channels-last -> NCHW
    # exactly once, at the very end (kept to match PyTorch output layout).
    return out.reshape(N, Ho3, Wo3, C3).transpose(0, 3, 1, 2)


def _init_conv_params(key, cout, cin, k=2):
    """Deterministic init mimicking PyTorch Conv2d default (kaiming-uniform)."""
    kw, kb = jax.random.split(key)
    fan_in = cin * k * k
    bound = 1.0 / jnp.sqrt(jnp.float32(fan_in))
    w = jax.random.uniform(kw, (cout, cin, k, k), jnp.float32, -bound, bound)
    b = jax.random.uniform(kb, (cout,), jnp.float32, -bound, bound)
    return w, b


def _reference_forward(x, raw_params):
    """Pure-XLA reference (independent formulation, full precision)."""
    y = x
    pads = (2, 0, 0)
    for (w, b), p in zip(raw_params, pads):
        y = jax.lax.conv_general_dilated(
            y, w, window_strides=(2, 2), padding=((p, p), (p, p)),
            dimension_numbers=("NCHW", "OIHW", "NCHW"),
            precision=jax.lax.Precision.HIGHEST)
        y = jnp.maximum(y + b.reshape(1, -1, 1, 1), 0.0)
    return y


if __name__ == "__main__":
    key = jax.random.PRNGKey(0)
    k_x, k1, k2, k3 = jax.random.split(key, 4)

    # Input: NCHW, single channel (Conv2d(1, 128, ...) expects Cin == 1).
    x = jax.random.normal(k_x, (2, 1, 16, 16), jnp.float32)

    raw_params = (
        _init_conv_params(k1, 128, 1),
        _init_conv_params(k2, 256, 128),
        _init_conv_params(k3, 512, 256),
    )
    params = prepare_params(raw_params)   # one-time weight reshape + bf16 cast

    fwd = jax.jit(cae_forward)
    y = jax.block_until_ready(fwd(x, params))

    assert y.shape == (2, 512, 2, 2), y.shape
    assert y.dtype == jnp.float32
    assert bool(jnp.all(y >= 0.0))  # ReLU output

    # Numerical check vs a full-precision XLA conv reference (kernel uses
    # bf16 MXU operands with f32 accumulation -> loose tolerance).
    y_ref = jax.block_until_ready(_reference_forward(x, raw_params))
    assert bool(jnp.allclose(y, y_ref, rtol=5e-2, atol=5e-2)), (
        float(jnp.max(jnp.abs(y - y_ref))))

    print("KERNEL_OK")
</pallas_src>

<mosaic_0001>
module attributes {stable_mosaic.version = 11 : i64} {
  func.func @_cae_fused_kernel(%arg0: i32, %arg1: memref<1x128x8xf32, #tpu.memory_space<vmem>>, %arg2: memref<8x128xbf16, #tpu.memory_space<vmem>>, %arg3: memref<1x128xf32, #tpu.memory_space<vmem>>, %arg4: memref<512x256xbf16, #tpu.memory_space<vmem>>, %arg5: memref<1x256xf32, #tpu.memory_space<vmem>>, %arg6: memref<1024x512xbf16, #tpu.memory_space<vmem>>, %arg7: memref<1x512xf32, #tpu.memory_space<vmem>>, %arg8: memref<1x8x512xf32, #tpu.memory_space<vmem>>) attributes {dimension_semantics = [#tpu.dimension_semantics<parallel>], iteration_bounds = array<i64: 1>, scalar_prefetch = 0 : i64, scratch_operands = 0 : i64, tpu.core_type = #tpu.core_type<tc>, window_params = [{transform_indices = @transform_0, window_bounds = array<i64: 1, 128, 8>}, {pipeline_mode = #tpu.pipeline_mode<synchronous>, transform_indices = @transform_1, window_bounds = array<i64: 8, 128>}, {pipeline_mode = #tpu.pipeline_mode<synchronous>, transform_indices = @transform_2, window_bounds = array<i64: 1, 128>}, {pipeline_mode = #tpu.pipeline_mode<synchronous>, transform_indices = @transform_3, window_bounds = array<i64: 512, 256>}, {pipeline_mode = #tpu.pipeline_mode<synchronous>, transform_indices = @transform_4, window_bounds = array<i64: 1, 256>}, {pipeline_mode = #tpu.pipeline_mode<synchronous>, transform_indices = @transform_5, window_bounds = array<i64: 1024, 512>}, {pipeline_mode = #tpu.pipeline_mode<synchronous>, transform_indices = @transform_6, window_bounds = array<i64: 1, 512>}, {transform_indices = @transform_7, window_bounds = array<i64: 1, 8, 512>}]} {
    %c0 = arith.constant 0 : index
    %c0_0 = arith.constant 0 : index
    %c0_1 = arith.constant 0 : index
    %0 = vector.load %arg1[%c0, %c0_0, %c0_1] : memref<1x128x8xf32, #tpu.memory_space<vmem>>, vector<1x128x8xf32>
    %1 = vector.shape_cast %0 : vector<1x128x8xf32> to vector<128x8xf32>
    %2 = arith.truncf %1 : vector<128x8xf32> to vector<128x8xbf16>
    %c0_2 = arith.constant 0 : index
    %c0_3 = arith.constant 0 : index
    %3 = vector.load %arg2[%c0_2, %c0_3] : memref<8x128xbf16, #tpu.memory_space<vmem>>, vector<8x128xbf16>
    %cst = arith.constant dense<0.000000e+00> : vector<128x128xf32>
    %4 = tpu.matmul %2, %3, %cst {dimension_numbers = #tpu.dot_dimension_numbers<[1], [0], [0], [1], [0, 0, 1, 1], [], []>} : vector<128x8xbf16>, vector<8x128xbf16>, vector<128x128xf32> -> vector<128x128xf32>
    %c0_4 = arith.constant 0 : index
    %c0_5 = arith.constant 0 : index
    %5 = vector.load %arg3[%c0_4, %c0_5] : memref<1x128xf32, #tpu.memory_space<vmem>>, vector<1x128xf32>
    %6 = vector.broadcast %5 : vector<1x128xf32> to vector<128x128xf32>
    %7 = arith.addf %4, %6 : vector<128x128xf32>
    %cst_6 = arith.constant 0.000000e+00 : f32
    %8 = vector.broadcast %cst_6 : f32 to vector<128x128xf32>
    %9 = arith.maximumf %7, %8 : vector<128x128xf32>
    %10 = arith.truncf %9 : vector<128x128xf32> to vector<128x128xbf16>
    %11 = vector.extract_strided_slice %10 {offsets = [0, 0], sizes = [32, 128], strides = [1, 1]} : vector<128x128xbf16> to vector<32x128xbf16>
    %12 = vector.extract_strided_slice %10 {offsets = [32, 0], sizes = [32, 128], strides = [1, 1]} : vector<128x128xbf16> to vector<32x128xbf16>
    %13 = vector.extract_strided_slice %10 {offsets = [64, 0], sizes = [32, 128], strides = [1, 1]} : vector<128x128xbf16> to vector<32x128xbf16>
    %14 = vector.extract_strided_slice %10 {offsets = [96, 0], sizes = [32, 128], strides = [1, 1]} : vector<128x128xbf16> to vector<32x128xbf16>
    %15 = tpu.concatenate %11, %12, %13, %14 in 1 : vector<32x128xbf16>, vector<32x128xbf16>, vector<32x128xbf16>, vector<32x128xbf16> -> vector<32x512xbf16>
    %c0_7 = arith.constant 0 : index
    %c0_8 = arith.constant 0 : index
    %16 = vector.load %arg4[%c0_7, %c0_8] : memref<512x256xbf16, #tpu.memory_space<vmem>>, vector<512x256xbf16>
    %cst_9 = arith.constant dense<0.000000e+00> : vector<32x256xf32>
    %17 = tpu.matmul %15, %16, %cst_9 {dimension_numbers = #tpu.dot_dimension_numbers<[1], [0], [0], [1], [0, 0, 1, 1], [], []>} : vector<32x512xbf16>, vector<512x256xbf16>, vector<32x256xf32> -> vector<32x256xf32>
    %c0_10 = arith.constant 0 : index
    %c0_11 = arith.constant 0 : index
    %18 = vector.load %arg5[%c0_10, %c0_11] : memref<1x256xf32, #tpu.memory_space<vmem>>, vector<1x256xf32>
    %19 = vector.broadcast %18 : vector<1x256xf32> to vector<32x256xf32>
    %20 = arith.addf %17, %19 : vector<32x256xf32>
    %cst_12 = arith.constant 0.000000e+00 : f32
    %21 = vector.broadcast %cst_12 : f32 to vector<32x256xf32>
    %22 = arith.maximumf %20, %21 : vector<32x256xf32>
    %23 = arith.truncf %22 : vector<32x256xf32> to vector<32x256xbf16>
    %24 = vector.extract_strided_slice %23 {offsets = [0, 0], sizes = [8, 256], strides = [1, 1]} : vector<32x256xbf16> to vector<8x256xbf16>
    %25 = vector.extract_strided_slice %23 {offsets = [8, 0], sizes = [8, 256], strides = [1, 1]} : vector<32x256xbf16> to vector<8x256xbf16>
    %26 = vector.extract_strided_slice %23 {offsets = [16, 0], sizes = [8, 256], strides = [1, 1]} : vector<32x256xbf16> to vector<8x256xbf16>
    %27 = vector.extract_strided_slice %23 {offsets = [24, 0], sizes = [8, 256], strides = [1, 1]} : vector<32x256xbf16> to vector<8x256xbf16>
    %28 = tpu.concatenate %24, %25, %26, %27 in 1 : vector<8x256xbf16>, vector<8x256xbf16>, vector<8x256xbf16>, vector<8x256xbf16> -> vector<8x1024xbf16>
    %c0_13 = arith.constant 0 : index
    %c0_14 = arith.constant 0 : index
    %29 = vector.load %arg6[%c0_13, %c0_14] : memref<1024x512xbf16, #tpu.memory_space<vmem>>, vector<1024x512xbf16>
    %cst_15 = arith.constant dense<0.000000e+00> : vector<8x512xf32>
    %30 = tpu.matmul %28, %29, %cst_15 {dimension_numbers = #tpu.dot_dimension_numbers<[1], [0], [0], [1], [0, 0, 1, 1], [], []>} : vector<8x1024xbf16>, vector<1024x512xbf16>, vector<8x512xf32> -> vector<8x512xf32>
    %c0_16 = arith.constant 0 : index
    %c0_17 = arith.constant 0 : index
    %31 = vector.load %arg7[%c0_16, %c0_17] : memref<1x512xf32, #tpu.memory_space<vmem>>, vector<1x512xf32>
    %32 = vector.broadcast %31 : vector<1x512xf32> to vector<8x512xf32>
    %33 = arith.addf %30, %32 : vector<8x512xf32>
    %cst_18 = arith.constant 0.000000e+00 : f32
    %34 = vector.broadcast %cst_18 : f32 to vector<8x512xf32>
    %35 = arith.maximumf %33, %34 : vector<8x512xf32>
    %c0_19 = arith.constant 0 : index
    %c0_20 = arith.constant 0 : index
    %c0_21 = arith.constant 0 : index
    %36 = vector.load %arg8[%c0_19, %c0_20, %c0_21] : memref<1x8x512xf32, #tpu.memory_space<vmem>>, vector<1x8x512xf32>
    %37 = vector.shape_cast %36 : vector<1x8x512xf32> to vector<8x512xf32>
    %38 = vector.shape_cast %35 : vector<8x512xf32> to vector<1x8x512xf32>
    tpu.vector_store %arg8[%c0_19, %c0_20, %c0_21], %38 {strides = array<i32>} : memref<1x8x512xf32, #tpu.memory_space<vmem>>, vector<1x8x512xf32>,
    return
  }
  func.func @transform_0(%arg0: i32) -> (i32, i32, i32) {
    %c0_i32 = arith.constant 0 : i32
    %c0_i32_0 = arith.constant 0 : i32
    %c0_i32_1 = arith.constant 0 : i32
    return %arg0, %c0_i32, %c0_i32_0 : i32, i32, i32
  }
  func.func @transform_1(%arg0: i32) -> (i32, i32) {
    %c0_i32 = arith.constant 0 : i32
    %c0_i32_0 = arith.constant 0 : i32
    %c0_i32_1 = arith.constant 0 : i32
    return %c0_i32, %c0_i32_0 : i32, i32
  }
  func.func @transform_2(%arg0: i32) -> (i32, i32) {
    %c0_i32 = arith.constant 0 : i32
    %c0_i32_0 = arith.constant 0 : i32
    %c0_i32_1 = arith.constant 0 : i32
    return %c0_i32, %c0_i32_0 : i32, i32
  }
  func.func @transform_3(%arg0: i32) -> (i32, i32) {
    %c0_i32 = arith.constant 0 : i32
    %c0_i32_0 = arith.constant 0 : i32
    %c0_i32_1 = arith.constant 0 : i32
    return %c0_i32, %c0_i32_0 : i32, i32
  }
  func.func @transform_4(%arg0: i32) -> (i32, i32) {
    %c0_i32 = arith.constant 0 : i32
    %c0_i32_0 = arith.constant 0 : i32
    %c0_i32_1 = arith.constant 0 : i32
    return %c0_i32, %c0_i32_0 : i32, i32
  }
  func.func @transform_5(%arg0: i32) -> (i32, i32) {
    %c0_i32 = arith.constant 0 : i32
    %c0_i32_0 = arith.constant 0 : i32
    %c0_i32_1 = arith.constant 0 : i32
    return %c0_i32, %c0_i32_0 : i32, i32
  }
  func.func @transform_6(%arg0: i32) -> (i32, i32) {
    %c0_i32 = arith.constant 0 : i32
    %c0_i32_0 = arith.constant 0 : i32
    %c0_i32_1 = arith.constant 0 : i32
    return %c0_i32, %c0_i32_0 : i32, i32
  }
  func.func @transform_7(%arg0: i32) -> (i32, i32, i32) {
    %c0_i32 = arith.constant 0 : i32
    %c0_i32_0 = arith.constant 0 : i32
    %c0_i32_1 = arith.constant 0 : i32
    return %arg0, %c0_i32, %c0_i32_0 : i32, i32, i32
  }
}

</mosaic_0001>

<llo_original>
// kernel: cae_forward.1
$region0: #{cae_forward.1}
  #allocation0 [shape = 'u32[]', space=smem, size = 0x4, offset = 0x4, fixed_abs, tag = 'smem constant byte address 0x4 - core index']
  #allocation1 [shape = 'u32[144,128]{1,0:T(1,128)}', space=vmem, size = 0x12000, scoped, tag = 'internal scratch']
  %s0 = inlined_call_operand.vmem [shape: f32[1,128,8], index: 0, kind: input, shape index: {}]
  %s1 = inlined_call_operand.vmem [shape: bf16[8,128], index: 1, kind: input, shape index: {}]
  %s2 = inlined_call_operand.vmem [shape: f32[1,128], index: 2, kind: input, shape index: {}]
  %s3 = inlined_call_operand.vmem [shape: bf16[512,256], index: 3, kind: input, shape index: {}]
  %s4 = inlined_call_operand.vmem [shape: f32[1,256], index: 4, kind: input, shape index: {}]
  %s5 = inlined_call_operand.hbm [shape: bf16[1024,512], index: 5, kind: input, shape index: {}]
  %s6 = inlined_call_operand.vmem [shape: f32[1,512], index: 6, kind: input, shape index: {}]
  %s7 = inlined_call_operand.vmem [shape: f32[1,8,512], index: 7, kind: output, shape index: {}]
  %s8 = sld [smem:[#allocation0]]
  $region42: #{cae_forward.1} parent=0
    _
  %s10 = ssub.s32 1, %s8
  %s11 = scalar_select 0, %s10, %s8
  $region1: #{cae_forward.1} parent=0
    #allocation2 [shape = 'u8[1048576]{0}', space=vmem, size = 0x100000, scoped, tag = 'input window, operand 5, single buffered']
    #allocation3 [shape = 's32[1]{0}', space=sflag, size = 0x4, scoped, tag = 'scoped memory for cae_forward.1']
    %12 = vsyncpa [#allocation3], 0
    // Predicated region
    $region2: #{cae_forward.1} parent=1 // pred_check
      _
    $region3: #{cae_forward.1} parent=1 // pred_check_branch
      %14 = sbr.rel (0) target = $region5
    $region4: #{cae_forward.1} parent=1 // pred_region
      _
    $region5: #{cae_forward.1} parent=1 // pred_fallthru
      _
    // Predicated region
    $region6: #{cae_forward.1} parent=1 // pred_check
      _
    $region7: #{cae_forward.1} parent=1 // pred_check_branch
      %16 = sbr.rel (0) target = $region9
    $region8: #{cae_forward.1} parent=1 // pred_region
      _
    $region9: #{cae_forward.1} parent=1 // pred_fallthru
      _
    // Predicated region
    $region10: #{cae_forward.1} parent=1 // pred_check
      _
    $region11: #{cae_forward.1} parent=1 // pred_check_branch
      %18 = sbr.rel (0) target = $region13
    $region12: #{cae_forward.1} parent=1 // pred_region
      _
    $region13: #{cae_forward.1} parent=1 // pred_fallthru
      _
    // Predicated region
    $region14: #{cae_forward.1} parent=1 // pred_check
      _
    $region15: #{cae_forward.1} parent=1 // pred_check_branch
      %20 = sbr.rel (0) target = $region17
    $region16: #{cae_forward.1} parent=1 // pred_region
      _
    $region17: #{cae_forward.1} parent=1 // pred_fallthru
      _
    // Predicated region
    $region18: #{cae_forward.1} parent=1 // pred_check
      _
    $region19: #{cae_forward.1} parent=1 // pred_check_branch
      %22 = sbr.rel (0) target = $region21
    $region20: #{cae_forward.1} parent=1 // pred_region
      _
    $region21: #{cae_forward.1} parent=1 // pred_fallthru
      _
    // Predicated region
    $region22: #{cae_forward.1} parent=1 // pred_check
      _
    $region23: #{cae_forward.1} parent=1 // pred_check_branch
      %24 = sbr.rel (0) target = $region25
    $region24: #{cae_forward.1} parent=1 // pred_region
      %s26 = ssub.s32 32768, 32768
      %27 = vsyncadd [#allocation3], %s26
      %s28 = sshll.u32 [#allocation2], 4
      %s29 = int_to_ptr.vmem [resolvable:$true] %s28
      %34 = dma.hbm_to_vmem [thread:$0]  %s5, 32768, %s29, [#allocation3], 256, 256, 16
    $region25: #{cae_forward.1} parent=1 // pred_fallthru
      _
    // Predicated region
    $region26: #{cae_forward.1} parent=1 // pred_check
      _
    $region27: #{cae_forward.1} parent=1 // pred_check_branch
      %36 = sbr.rel (0) target = $region29
    $region28: #{cae_forward.1} parent=1 // pred_region
      _
    $region29: #{cae_forward.1} parent=1 // pred_fallthru
      _
    // Predicated region
    $region30: #{cae_forward.1} parent=1 // pred_check
      _
    $region31: #{cae_forward.1} parent=1 // pred_check_branch
      %38 = sbr.rel (0) target = $region33
    $region32: #{cae_forward.1} parent=1 // pred_region
      %39 = dma.done [#allocation3], 32768
    $region33: #{cae_forward.1} parent=1 // pred_fallthru
      _
    %v41 = vld [vmem:[%s0] sm:$0xff]
    %v42 = vld [vmem:[%s0 + $0x8] sm:$0xff]
    %v43 = vld [vmem:[%s0 + $0x10] sm:$0xff]
    %v44 = vld [vmem:[%s0 + $0x18] sm:$0xff]
    %v45 = vld [vmem:[%s0 + $0x20] sm:$0xff]
    %v46 = vld [vmem:[%s0 + $0x28] sm:$0xff]
    %v47 = vld [vmem:[%s0 + $0x30] sm:$0xff]
    %v48 = vld [vmem:[%s0 + $0x38] sm:$0xff]
    %v49 = vld [vmem:[%s0 + $0x40] sm:$0xff]
    %v50 = vld [vmem:[%s0 + $0x48] sm:$0xff]
    %v51 = vld [vmem:[%s0 + $0x50] sm:$0xff]
    %v52 = vld [vmem:[%s0 + $0x58] sm:$0xff]
    %v53 = vld [vmem:[%s0 + $0x60] sm:$0xff]
    %v54 = vld [vmem:[%s0 + $0x68] sm:$0xff]
    %v55 = vld [vmem:[%s0 + $0x70] sm:$0xff]
    %v56 = vld [vmem:[%s0 + $0x78] sm:$0xff]
    %v57 = vpack.c.bf16 %v42, %v41
    %v58 = vpack.c.bf16 %v44, %v43
    %v59 = vpack.c.bf16 %v46, %v45
    %v60 = vpack.c.bf16 %v48, %v47
    %v61 = vpack.c.bf16 %v50, %v49
    %v62 = vpack.c.bf16 %v52, %v51
    %v63 = vpack.c.bf16 %v54, %v53
    %v64 = vpack.c.bf16 %v56, %v55
    %v65 = vld [vmem:[%s1] sm:$0xf]
    %v66 = vld [vmem:[%s2] sm:$0x1]
    %v68 = vlaneseq
    %v69 = vshrl.u32 %v68, 7
    %v70 = vsub.s32 0, %v69
    %v71 = vrot.slane %v66, %v70
    %vm73 = vcmask 64512
    %v75 = vsel %vm73, %v57, 0
    %v78 = vsel %vm73, %v58, 0
    %v81 = vsel %vm73, %v59, 0
    %v84 = vsel %vm73, %v60, 0
    %v87 = vsel %vm73, %v61, 0
    %v90 = vsel %vm73, %v62, 0
    %v93 = vsel %vm73, %v63, 0
    %v96 = vsel %vm73, %v64, 0
    %vm98 = vcmask 1043456
    %v100 = vsel %vm98, %v65, 0
    %102 = vmatprep.subr.bf16.mxu0 0
    %103 = vmatpush1.bf16.msra.mxu0 %v100
    %104 = vmatprep.subr.bf16.mxu0 0
    %105 = vmatpush1.bf16.msra.mxu0 0
    %106 = vmatprep.subr.bf16.mxu0 0
    %107 = vmatpush1.bf16.msra.mxu0 0
    %108 = vmatprep.subr.bf16.mxu0 0
    %109 = vmatpush1.bf16.msra.mxu0 0
    %110 = vmatprep.subr.bf16.mxu0 0
    %111 = vmatpush1.bf16.msra.mxu0 0
    %112 = vmatprep.subr.bf16.mxu0 0
    %113 = vmatpush1.bf16.msra.mxu0 0
    %114 = vmatprep.subr.bf16.mxu0 0
    %115 = vmatpush1.bf16.msra.mxu0 0
    %116 = vmatprep.subr.bf16.mxu0 0
    %117 = vmatpush1.bf16.msra.mxu0 0
    %118 = vmatprep.subr.bf16.mxu0 0
    %119 = vmatpush1.bf16.msra.mxu0 0
    %120 = vmatprep.subr.bf16.mxu0 0
    %121 = vmatpush1.bf16.msra.mxu0 0
    %122 = vmatprep.subr.bf16.mxu0 0
    %123 = vmatpush1.bf16.msra.mxu0 0
    %124 = vmatprep.subr.bf16.mxu0 0
    %125 = vmatpush1.bf16.msra.mxu0 0
    %126 = vmatprep.subr.bf16.mxu0 0
    %127 = vmatpush1.bf16.msra.mxu0 0
    %128 = vmatprep.subr.bf16.mxu0 0
    %129 = vmatpush1.bf16.msra.mxu0 0
    %130 = vmatprep.subr.bf16.mxu0 0
    %131 = vmatpush1.bf16.msra.mxu0 0
    %132 = vmatprep.subr.bf16.mxu0 0
    %133 = vmatpush1.bf16.msra.mxu0 0
    %134 = vmatprep.mubr.bf16.mxu0 0
    %135 = vmatmul.mubr.bf16.gmra.mrb[0].mxu0 %v75
    %v136 = vpop.f32.mrb[0].mxu0
    %v137 = vadd.f32 %v71, %v136
    %v138 = vpop.f32.mrb[0].mxu0
    %v139 = vpop.f32.mrb[0].mxu0
    %v140 = vadd.f32 %v71, %v139
    %v141 = vpop.f32.mrb[0].mxu0
    %142 = vmatprep.mubr.bf16.mxu0 0
    %143 = vmatmul.mubr.bf16.gmra.mrb[0].mxu0 %v78
    %v144 = vpop.f32.mrb[0].mxu0
    %v145 = vadd.f32 %v71, %v144
    %v146 = vpop.f32.mrb[0].mxu0
    %v147 = vpop.f32.mrb[0].mxu0
    %v148 = vadd.f32 %v71, %v147
    %v149 = vpop.f32.mrb[0].mxu0
    %150 = vmatprep.mubr.bf16.mxu0 0
    %151 = vmatmul.mubr.bf16.gmra.mrb[0].mxu0 %v81
    %v152 = vpop.f32.mrb[0].mxu0
    %v153 = vadd.f32 %v71, %v152
    %v154 = vpop.f32.mrb[0].mxu0
    %v155 = vpop.f32.mrb[0].mxu0
    %v156 = vadd.f32 %v71, %v155
    %v157 = vpop.f32.mrb[0].mxu0
    %158 = vmatprep.mubr.bf16.mxu0 0
    %159 = vmatmul.mubr.bf16.gmra.mrb[0].mxu0 %v84
    %v160 = vpop.f32.mrb[0].mxu0
    %v161 = vadd.f32 %v71, %v160
    %v162 = vpop.f32.mrb[0].mxu0
    %v163 = vpop.f32.mrb[0].mxu0
    %v164 = vadd.f32 %v71, %v163
    %v165 = vpop.f32.mrb[0].mxu0
    %166 = vmatprep.mubr.bf16.mxu0 0
    %167 = vmatmul.mubr.bf16.gmra.mrb[0].mxu0 %v87
    %v168 = vpop.f32.mrb[0].mxu0
    %v169 = vadd.f32 %v71, %v168
    %v170 = vpop.f32.mrb[0].mxu0
    %v171 = vpop.f32.mrb[0].mxu0
    %v172 = vadd.f32 %v71, %v171
    %v173 = vpop.f32.mrb[0].mxu0
    %174 = vmatprep.mubr.bf16.mxu0 0
    %175 = vmatmul.mubr.bf16.gmra.mrb[0].mxu0 %v90
    %v176 = vpop.f32.mrb[0].mxu0
    %v177 = vadd.f32 %v71, %v176
    %v178 = vpop.f32.mrb[0].mxu0
    %v179 = vpop.f32.mrb[0].mxu0
    %v180 = vadd.f32 %v71, %v179
    %v181 = vpop.f32.mrb[0].mxu0
    %182 = vmatprep.mubr.bf16.mxu0 0
    %183 = vmatmul.mubr.bf16.gmra.mrb[0].mxu0 %v93
    %v184 = vpop.f32.mrb[0].mxu0
    %v185 = vadd.f32 %v71, %v184
    %v186 = vpop.f32.mrb[0].mxu0
    %v187 = vpop.f32.mrb[0].mxu0
    %v188 = vadd.f32 %v71, %v187
    %v189 = vpop.f32.mrb[0].mxu0
    %190 = vmatprep.mubr.bf16.mxu0 0
    %191 = vmatmul.mubr.bf16.gmra.mrb[0].mxu0 %v96
    %v192 = vpop.f32.mrb[0].mxu0
    %v193 = vadd.f32 %v71, %v192
    %v194 = vpop.f32.mrb[0].mxu0
    %v195 = vpop.f32.mrb[0].mxu0
    %v196 = vadd.f32 %v71, %v195
    %v197 = vpop.f32.mrb[0].mxu0
    %198 = vdwg.mxu0
    %v199 = vmax.f32 %v137, 0.0
    %v200 = vmax.f32 %v140, 0.0
    %v201 = vmax.f32 %v145, 0.0
    %v202 = vmax.f32 %v148, 0.0
    %v203 = vmax.f32 %v153, 0.0
    %v204 = vmax.f32 %v156, 0.0
    %v205 = vmax.f32 %v161, 0.0
    %v206 = vmax.f32 %v164, 0.0
    %v207 = vmax.f32 %v169, 0.0
    %v208 = vmax.f32 %v172, 0.0
    %v209 = vmax.f32 %v177, 0.0
    %v210 = vmax.f32 %v180, 0.0
    %v211 = vmax.f32 %v185, 0.0
    %v212 = vmax.f32 %v188, 0.0
    %v213 = vmax.f32 %v193, 0.0
    %v214 = vmax.f32 %v196, 0.0
    %v215 = vpack.c.bf16 %v200, %v199
    %v216 = vpack.c.bf16 %v202, %v201
    %v217 = vpack.c.bf16 %v204, %v203
    %v218 = vpack.c.bf16 %v206, %v205
    %v219 = vpack.c.bf16 %v208, %v207
    %v220 = vpack.c.bf16 %v210, %v209
    %v221 = vpack.c.bf16 %v212, %v211
    %v222 = vpack.c.bf16 %v214, %v213
    %v223 = vld [vmem:[%s3] sm:$0xff]
    %v224 = vld [vmem:[%s3 + $0x8] sm:$0xff]
    %v225 = vld [vmem:[%s3 + $0x10] sm:$0xff]
    %v226 = vld [vmem:[%s3 + $0x18] sm:$0xff]
    %v227 = vld [vmem:[%s3 + $0x20] sm:$0xff]
    %v228 = vld [vmem:[%s3 + $0x28] sm:$0xff]
    %v229 = vld [vmem:[%s3 + $0x30] sm:$0xff]
    %v230 = vld [vmem:[%s3 + $0x38] sm:$0xff]
    %v231 = vld [vmem:[%s3 + $0x40] sm:$0xff]
    %v232 = vld [vmem:[%s3 + $0x48] sm:$0xff]
    %v233 = vld [vmem:[%s3 + $0x50] sm:$0xff]
    %v234 = vld [vmem:[%s3 + $0x58] sm:$0xff]
    %v235 = vld [vmem:[%s3 + $0x60] sm:$0xff]
    %v236 = vld [vmem:[%s3 + $0x68] sm:$0xff]
    %v237 = vld [vmem:[%s3 + $0x70] sm:$0xff]
    %v238 = vld [vmem:[%s3 + $0x78] sm:$0xff]
    %v239 = vld [vmem:[%s3 + $0x80] sm:$0xff]
    %v240 = vld [vmem:[%s3 + $0x88] sm:$0xff]
    %v241 = vld [vmem:[%s3 + $0x90] sm:$0xff]
    %v242 = vld [vmem:[%s3 + $0x98] sm:$0xff]
    %v243 = vld [vmem:[%s3 + $0xa0] sm:$0xff]
    %v244 = vld [vmem:[%s3 + $0xa8] sm:$0xff]
    %v245 = vld [vmem:[%s3 + $0xb0] sm:$0xff]
    %v246 = vld [vmem:[%s3 + $0xb8] sm:$0xff]
    %v247 = vld [vmem:[%s3 + $0xc0] sm:$0xff]
    %v248 = vld [vmem:[%s3 + $0xc8] sm:$0xff]
    %v249 = vld [vmem:[%s3 + $0xd0] sm:$0xff]
    %v250 = vld [vmem:[%s3 + $0xd8] sm:$0xff]
    %v251 = vld [vmem:[%s3 + $0xe0] sm:$0xff]
    %v252 = vld [vmem:[%s3 + $0xe8] sm:$0xff]
    %v253 = vld [vmem:[%s3 + $0xf0] sm:$0xff]
    %v254 = vld [vmem:[%s3 + $0xf8] sm:$0xff]
    %v255 = vld [vmem:[%s3 + $0x100] sm:$0xff]
    %v256 = vld [vmem:[%s3 + $0x108] sm:$0xff]
    %v257 = vld [vmem:[%s3 + $0x110] sm:$0xff]
    %v258 = vld [vmem:[%s3 + $0x118] sm:$0xff]
    %v259 = vld [vmem:[%s3 + $0x120] sm:$0xff]
    %v260 = vld [vmem:[%s3 + $0x128] sm:$0xff]
    %v261 = vld [vmem:[%s3 + $0x130] sm:$0xff]
    %v262 = vld [vmem:[%s3 + $0x138] sm:$0xff]
    %v263 = vld [vmem:[%s3 + $0x140] sm:$0xff]
    %v264 = vld [vmem:[%s3 + $0x148] sm:$0xff]
    %v265 = vld [vmem:[%s3 + $0x150] sm:$0xff]
    %v266 = vld [vmem:[%s3 + $0x158] sm:$0xff]
    %v267 = vld [vmem:[%s3 + $0x160] sm:$0xff]
    %v268 = vld [vmem:[%s3 + $0x168] sm:$0xff]
    %v269 = vld [vmem:[%s3 + $0x170] sm:$0xff]
    %v270 = vld [vmem:[%s3 + $0x178] sm:$0xff]
    %v271 = vld [vmem:[%s3 + $0x180] sm:$0xff]
    %v272 = vld [vmem:[%s3 + $0x188] sm:$0xff]
    %v273 = vld [vmem:[%s3 + $0x190] sm:$0xff]
    %v274 = vld [vmem:[%s3 + $0x198] sm:$0xff]
    %v275 = vld [vmem:[%s3 + $0x1a0] sm:$0xff]
    %v276 = vld [vmem:[%s3 + $0x1a8] sm:$0xff]
    %v277 = vld [vmem:[%s3 + $0x1b0] sm:$0xff]
    %v278 = vld [vmem:[%s3 + $0x1b8] sm:$0xff]
    %v279 = vld [vmem:[%s3 + $0x1c0] sm:$0xff]
    %v280 = vld [vmem:[%s3 + $0x1c8] sm:$0xff]
    %v281 = vld [vmem:[%s3 + $0x1d0] sm:$0xff]
    %v282 = vld [vmem:[%s3 + $0x1d8] sm:$0xff]
    %v283 = vld [vmem:[%s3 + $0x1e0] sm:$0xff]
    %v284 = vld [vmem:[%s3 + $0x1e8] sm:$0xff]
    %v285 = vld [vmem:[%s3 + $0x1f0] sm:$0xff]
    %v286 = vld [vmem:[%s3 + $0x1f8] sm:$0xff]
    %v287 = vld [vmem:[%s4] sm:$0x3]
    %v289 = vlaneseq
    %v290 = vshrl.u32 %v289, 7
    %v291 = vsub.s32 0, %v290
    %v292 = vrot.slane %v287, %v291
    %v293 = vlaneseq
    %v294 = vshrl.u32 %v293, 7
    %v295 = vsub.s32 1, %v294
    %v296 = vrot.slane %v287, %v295
    %v363 = vunpack.c.l.b16 %v223
    %v364 = vunpack.c.h.b16 %v223
    %v365 = vunpack.c.l.b16 %v224
    %v366 = vunpack.c.h.b16 %v224
    %v367 = vunpack.c.l.b16 %v225
    %v368 = vunpack.c.h.b16 %v225
    %v369 = vunpack.c.l.b16 %v226
    %v370 = vunpack.c.h.b16 %v226
    %v371 = vunpack.c.l.b16 %v227
    %v372 = vunpack.c.h.b16 %v227
    %v373 = vunpack.c.l.b16 %v228
    %v374 = vunpack.c.h.b16 %v228
    %v375 = vunpack.c.l.b16 %v229
    %v376 = vunpack.c.h.b16 %v229
    %v377 = vunpack.c.l.b16 %v230
    %v378 = vunpack.c.h.b16 %v230
    %v379 = vunpack.c.l.b16 %v231
    %v380 = vunpack.c.h.b16 %v231
    %v381 = vunpack.c.l.b16 %v232
    %v382 = vunpack.c.h.b16 %v232
    %v383 = vunpack.c.l.b16 %v233
    %v384 = vunpack.c.h.b16 %v233
    %v385 = vunpack.c.l.b16 %v234
    %v386 = vunpack.c.h.b16 %v234
    %v387 = vunpack.c.l.b16 %v235
    %v388 = vunpack.c.h.b16 %v235
    %v389 = vunpack.c.l.b16 %v236
    %v390 = vunpack.c.h.b16 %v236
    %v391 = vunpack.c.l.b16 %v237
    %v392 = vunpack.c.h.b16 %v237
    %v393 = vunpack.c.l.b16 %v238
    %v394 = vunpack.c.h.b16 %v238
    %v395 = vunpack.c.l.b16 %v239
    %v396 = vunpack.c.h.b16 %v239
    %v397 = vunpack.c.l.b16 %v240
    %v398 = vunpack.c.h.b16 %v240
    %v399 = vunpack.c.l.b16 %v241
    %v400 = vunpack.c.h.b16 %v241
    %v401 = vunpack.c.l.b16 %v242
    %v402 = vunpack.c.h.b16 %v242
    %v403 = vunpack.c.l.b16 %v243
    %v404 = vunpack.c.h.b16 %v243
    %v405 = vunpack.c.l.b16 %v244
    %v406 = vunpack.c.h.b16 %v244
    %v407 = vunpack.c.l.b16 %v245
    %v408 = vunpack.c.h.b16 %v245
    %v409 = vunpack.c.l.b16 %v246
    %v410 = vunpack.c.h.b16 %v246
    %v411 = vunpack.c.l.b16 %v247
    %v412 = vunpack.c.h.b16 %v247
    %v413 = vunpack.c.l.b16 %v248
    %v414 = vunpack.c.h.b16 %v248
    %v415 = vunpack.c.l.b16 %v249
    %v416 = vunpack.c.h.b16 %v249
    %v417 = vunpack.c.l.b16 %v250
    %v418 = vunpack.c.h.b16 %v250
    %v419 = vunpack.c.l.b16 %v251
    %v420 = vunpack.c.h.b16 %v251
    %v421 = vunpack.c.l.b16 %v252
    %v422 = vunpack.c.h.b16 %v252
    %v423 = vunpack.c.l.b16 %v253
    %v424 = vunpack.c.h.b16 %v253
    %v425 = vunpack.c.l.b16 %v254
    %v426 = vunpack.c.h.b16 %v254
    %v427 = vunpack.c.l.b16 %v255
    %v428 = vunpack.c.h.b16 %v255
    %v429 = vunpack.c.l.b16 %v256
    %v430 = vunpack.c.h.b16 %v256
    %v431 = vunpack.c.l.b16 %v257
    %v432 = vunpack.c.h.b16 %v257
    %v433 = vunpack.c.l.b16 %v258
    %v434 = vunpack.c.h.b16 %v258
    %v435 = vunpack.c.l.b16 %v259
    %v436 = vunpack.c.h.b16 %v259
    %v437 = vunpack.c.l.b16 %v260
    %v438 = vunpack.c.h.b16 %v260
    %v439 = vunpack.c.l.b16 %v261
    %v440 = vunpack.c.h.b16 %v261
    %v441 = vunpack.c.l.b16 %v262
    %v442 = vunpack.c.h.b16 %v262
    %v443 = vunpack.c.l.b16 %v263
    %v444 = vunpack.c.h.b16 %v263
    %v445 = vunpack.c.l.b16 %v264
    %v446 = vunpack.c.h.b16 %v264
    %v447 = vunpack.c.l.b16 %v265
    %v448 = vunpack.c.h.b16 %v265
    %v449 = vunpack.c.l.b16 %v266
    %v450 = vunpack.c.h.b16 %v266
    %v451 = vunpack.c.l.b16 %v267
    %v452 = vunpack.c.h.b16 %v267
    %v453 = vunpack.c.l.b16 %v268
    %v454 = vunpack.c.h.b16 %v268
    %v455 = vunpack.c.l.b16 %v269
    %v456 = vunpack.c.h.b16 %v269
    %v457 = vunpack.c.l.b16 %v270
    %v458 = vunpack.c.h.b16 %v270
    %v459 = vunpack.c.l.b16 %v271
    %v460 = vunpack.c.h.b16 %v271
    %v461 = vunpack.c.l.b16 %v272
    %v462 = vunpack.c.h.b16 %v272
    %v463 = vunpack.c.l.b16 %v273
    %v464 = vunpack.c.h.b16 %v273
    %v465 = vunpack.c.l.b16 %v274
    %v466 = vunpack.c.h.b16 %v274
    %v467 = vunpack.c.l.b16 %v275
    %v468 = vunpack.c.h.b16 %v275
    %v469 = vunpack.c.l.b16 %v276
    %v470 = vunpack.c.h.b16 %v276
    %v471 = vunpack.c.l.b16 %v277
    %v472 = vunpack.c.h.b16 %v277
    %v473 = vunpack.c.l.b16 %v278
    %v474 = vunpack.c.h.b16 %v278
    %v475 = vunpack.c.l.b16 %v279
    %v476 = vunpack.c.h.b16 %v279
    %v477 = vunpack.c.l.b16 %v280
    %v478 = vunpack.c.h.b16 %v280
    %v479 = vunpack.c.l.b16 %v281
    %v480 = vunpack.c.h.b16 %v281
    %v481 = vunpack.c.l.b16 %v282
    %v482 = vunpack.c.h.b16 %v282
    %v483 = vunpack.c.l.b16 %v283
    %v484 = vunpack.c.h.b16 %v283
    %v485 = vunpack.c.l.b16 %v284
    %v486 = vunpack.c.h.b16 %v284
    %v487 = vunpack.c.l.b16 %v285
    %v488 = vunpack.c.h.b16 %v285
    %v489 = vunpack.c.l.b16 %v286
    %v490 = vunpack.c.h.b16 %v286
    %v491 = vpack.c.b16 %v365, %v363
    %v492 = vpack.c.b16 %v366, %v364
    %v493 = vpack.c.b16 %v369, %v367
    %v494 = vpack.c.b16 %v370, %v368
    %v495 = vpack.c.b16 %v373, %v371
    %v496 = vpack.c.b16 %v374, %v372
    %v497 = vpack.c.b16 %v377, %v375
    %v498 = vpack.c.b16 %v378, %v376
    %v499 = vpack.c.b16 %v381, %v379
    %v500 = vpack.c.b16 %v382, %v380
    %v501 = vpack.c.b16 %v385, %v383
    %v502 = vpack.c.b16 %v386, %v384
    %v503 = vpack.c.b16 %v389, %v387
    %v504 = vpack.c.b16 %v390, %v388
    %v505 = vpack.c.b16 %v393, %v391
    %v506 = vpack.c.b16 %v394, %v392
    %v507 = vpack.c.b16 %v397, %v395
    %v508 = vpack.c.b16 %v398, %v396
    %v509 = vpack.c.b16 %v401, %v399
    %v510 = vpack.c.b16 %v402, %v400
    %v511 = vpack.c.b16 %v405, %v403
    %v512 = vpack.c.b16 %v406, %v404
    %v513 = vpack.c.b16 %v409, %v407
    %v514 = vpack.c.b16 %v410, %v408
    %v515 = vpack.c.b16 %v413, %v411
    %v516 = vpack.c.b16 %v414, %v412
    %v517 = vpack.c.b16 %v417, %v415
    %v518 = vpack.c.b16 %v418, %v416
    %v519 = vpack.c.b16 %v421, %v419
    %v520 = vpack.c.b16 %v422, %v420
    %v521 = vpack.c.b16 %v425, %v423
    %v522 = vpack.c.b16 %v426, %v424
    %v523 = vpack.c.b16 %v429, %v427
    %v524 = vpack.c.b16 %v430, %v428
    %v525 = vpack.c.b16 %v433, %v431
    %v526 = vpack.c.b16 %v434, %v432
    %v527 = vpack.c.b16 %v437, %v435
    %v528 = vpack.c.b16 %v438, %v436
    %v529 = vpack.c.b16 %v441, %v439
    %v530 = vpack.c.b16 %v442, %v440
    %v531 = vpack.c.b16 %v445, %v443
    %v532 = vpack.c.b16 %v446, %v444
    %v533 = vpack.c.b16 %v449, %v447
    %v534 = vpack.c.b16 %v450, %v448
    %v535 = vpack.c.b16 %v453, %v451
    %v536 = vpack.c.b16 %v454, %v452
    %v537 = vpack.c.b16 %v457, %v455
    %v538 = vpack.c.b16 %v458, %v456
    %v539 = vpack.c.b16 %v461, %v459
    %v540 = vpack.c.b16 %v462, %v460
    %v541 = vpack.c.b16 %v465, %v463
    %v542 = vpack.c.b16 %v466, %v464
    %v543 = vpack.c.b16 %v469, %v467
    %v544 = vpack.c.b16 %v470, %v468
    %v545 = vpack.c.b16 %v473, %v471
    %v546 = vpack.c.b16 %v474, %v472
    %v547 = vpack.c.b16 %v477, %v475
    %v548 = vpack.c.b16 %v478, %v476
    %v549 = vpack.c.b16 %v481, %v479
    %v550 = vpack.c.b16 %v482, %v480
    %v551 = vpack.c.b16 %v485, %v483
    %v552 = vpack.c.b16 %v486, %v484
    %v553 = vpack.c.b16 %v489, %v487
    %v554 = vpack.c.b16 %v490, %v488
    %619 = vmatprep.subr.bf16.mxu0 %v492
    %620 = vmatpush1.bf16.msra.mxu0 %v491
    %621 = vmatprep.subr.bf16.mxu0 %v494
    %622 = vmatpush1.bf16.msra.mxu0 %v493
    %623 = vmatprep.subr.bf16.mxu0 %v496
    %624 = vmatpush1.bf16.msra.mxu0 %v495
    %625 = vmatprep.subr.bf16.mxu0 %v498
    %626 = vmatpush1.bf16.msra.mxu0 %v497
    %627 = vmatprep.subr.bf16.mxu0 %v500
    %628 = vmatpush1.bf16.msra.mxu0 %v499
    %629 = vmatprep.subr.bf16.mxu0 %v502
    %630 = vmatpush1.bf16.msra.mxu0 %v501
    %631 = vmatprep.subr.bf16.mxu0 %v504
    %632 = vmatpush1.bf16.msra.mxu0 %v503
    %633 = vmatprep.subr.bf16.mxu0 %v506
    %634 = vmatpush1.bf16.msra.mxu0 %v505
    %635 = vmatprep.subr.bf16.mxu0 %v508
    %636 = vmatpush1.bf16.msra.mxu0 %v507
    %637 = vmatprep.subr.bf16.mxu0 %v510
    %638 = vmatpush1.bf16.msra.mxu0 %v509
    %639 = vmatprep.subr.bf16.mxu0 %v512
    %640 = vmatpush1.bf16.msra.mxu0 %v511
    %641 = vmatprep.subr.bf16.mxu0 %v514
    %642 = vmatpush1.bf16.msra.mxu0 %v513
    %643 = vmatprep.subr.bf16.mxu0 %v516
    %644 = vmatpush1.bf16.msra.mxu0 %v515
    %645 = vmatprep.subr.bf16.mxu0 %v518
    %646 = vmatpush1.bf16.msra.mxu0 %v517
    %647 = vmatprep.subr.bf16.mxu0 %v520
    %648 = vmatpush1.bf16.msra.mxu0 %v519
    %649 = vmatprep.subr.bf16.mxu0 %v522
    %650 = vmatpush1.bf16.msra.mxu0 %v521
    %651 = vmatprep.mubr.bf16.mxu0 %v217
    %652 = vmatmul.mubr.bf16.gmra.mrb[0].mxu0 %v215
    %v653 = vpop.f32.mrb[0].mxu0
    %v654 = vadd.f32 %v292, %v653
    %v655 = vpop.f32.mrb[0].mxu0
    %v656 = vadd.f32 %v296, %v655
    %v657 = vpop.f32.mrb[0].mxu0
    %v658 = vadd.f32 %v292, %v657
    %v659 = vpop.f32.mrb[0].mxu0
    %v660 = vadd.f32 %v296, %v659
    %661 = vmatprep.mubr.bf16.mxu0 %v218
    %662 = vmatmul.mubr.bf16.gmra.mrb[0].mxu0 %v216
    %v663 = vpop.f32.mrb[0].mxu0
    %v664 = vadd.f32 %v292, %v663
    %v665 = vpop.f32.mrb[0].mxu0
    %v666 = vadd.f32 %v296, %v665
    %v667 = vpop.f32.mrb[0].mxu0
    %v668 = vadd.f32 %v292, %v667
    %v669 = vpop.f32.mrb[0].mxu0
    %v670 = vadd.f32 %v296, %v669
    %671 = vdwg.mxu0
    %672 = vmatprep.subr.bf16.mxu0 %v524
    %673 = vmatpush1.bf16.msra.mxu0 %v523
    %674 = vmatprep.subr.bf16.mxu0 %v526
    %675 = vmatpush1.bf16.msra.mxu0 %v525
    %676 = vmatprep.subr.bf16.mxu0 %v528
    %677 = vmatpush1.bf16.msra.mxu0 %v527
    %678 = vmatprep.subr.bf16.mxu0 %v530
    %679 = vmatpush1.bf16.msra.mxu0 %v529
    %680 = vmatprep.subr.bf16.mxu0 %v532
    %681 = vmatpush1.bf16.msra.mxu0 %v531
    %682 = vmatprep.subr.bf16.mxu0 %v534
    %683 = vmatpush1.bf16.msra.mxu0 %v533
    %684 = vmatprep.subr.bf16.mxu0 %v536
    %685 = vmatpush1.bf16.msra.mxu0 %v535
    %686 = vmatprep.subr.bf16.mxu0 %v538
    %687 = vmatpush1.bf16.msra.mxu0 %v537
    %688 = vmatprep.subr.bf16.mxu0 %v540
    %689 = vmatpush1.bf16.msra.mxu0 %v539
    %690 = vmatprep.subr.bf16.mxu0 %v542
    %691 = vmatpush1.bf16.msra.mxu0 %v541
    %692 = vmatprep.subr.bf16.mxu0 %v544
    %693 = vmatpush1.bf16.msra.mxu0 %v543
    %694 = vmatprep.subr.bf16.mxu0 %v546
    %695 = vmatpush1.bf16.msra.mxu0 %v545
    %696 = vmatprep.subr.bf16.mxu0 %v548
    %697 = vmatpush1.bf16.msra.mxu0 %v547
    %698 = vmatprep.subr.bf16.mxu0 %v550
    %699 = vmatpush1.bf16.msra.mxu0 %v549
    %700 = vmatprep.subr.bf16.mxu0 %v552
    %701 = vmatpush1.bf16.msra.mxu0 %v551
    %702 = vmatprep.subr.bf16.mxu0 %v554
    %703 = vmatpush1.bf16.msra.mxu0 %v553
    %704 = vmatprep.mubr.bf16.mxu0 %v221
    %705 = vmatmul.mubr.bf16.gmra.mrb[0].mxu0 %v219
    %v706 = vpop.f32.mrb[0].mxu0
    %v707 = vadd.f32 %v654, %v706
    %v708 = vpop.f32.mrb[0].mxu0
    %v709 = vadd.f32 %v656, %v708
    %v710 = vpop.f32.mrb[0].mxu0
    %v711 = vadd.f32 %v658, %v710
    %v712 = vpop.f32.mrb[0].mxu0
    %v713 = vadd.f32 %v660, %v712
    %714 = vmatprep.mubr.bf16.mxu0 %v222
    %715 = vmatmul.mubr.bf16.gmra.mrb[0].mxu0 %v220
    %v716 = vpop.f32.mrb[0].mxu0
    %v717 = vadd.f32 %v664, %v716
    %v718 = vpop.f32.mrb[0].mxu0
    %v719 = vadd.f32 %v666, %v718
    %v720 = vpop.f32.mrb[0].mxu0
    %v721 = vadd.f32 %v668, %v720
    %v722 = vpop.f32.mrb[0].mxu0
    %v723 = vadd.f32 %v670, %v722
    %724 = vdwg.mxu0
    %v725 = vmax.f32 %v707, 0.0
    %v726 = vmax.f32 %v709, 0.0
    %v727 = vmax.f32 %v711, 0.0
    %v728 = vmax.f32 %v713, 0.0
    %v729 = vmax.f32 %v717, 0.0
    %v730 = vmax.f32 %v719, 0.0
    %v731 = vmax.f32 %v721, 0.0
    %v732 = vmax.f32 %v723, 0.0
    %v733 = vpack.c.bf16 %v727, %v725
    %v734 = vpack.c.bf16 %v728, %v726
    %v735 = vpack.c.bf16 %v731, %v729
    %v736 = vpack.c.bf16 %v732, %v730
    %v739 = vrot.slane %v733, 4
    %v740 = vrot.slane %v734, 4
    %v745 = vrot.slane %v735, 4
    %v746 = vrot.slane %v736, 4
    %v749 = vld [vmem:[#allocation2] sm:$0xff]
    %v750 = vld [vmem:[#allocation2 + $0x8] sm:$0xff]
    %v751 = vld [vmem:[#allocation2 + $0x10] sm:$0xff]
    %v752 = vld [vmem:[#allocation2 + $0x18] sm:$0xff]
    %v753 = vld [vmem:[#allocation2 + $0x20] sm:$0xff]
    %v754 = vld [vmem:[#allocation2 + $0x28] sm:$0xff]
    %v755 = vld [vmem:[#allocation2 + $0x30] sm:$0xff]
    %v756 = vld [vmem:[#allocation2 + $0x38] sm:$0xff]
    %v757 = vld [vmem:[#allocation2 + $0x40] sm:$0xff]
    %v758 = vld [vmem:[#allocation2 + $0x48] sm:$0xff]
    %v759 = vld [vmem:[#allocation2 + $0x50] sm:$0xff]
    %v760 = vld [vmem:[#allocation2 + $0x58] sm:$0xff]
    %v761 = vld [vmem:[#allocation2 + $0x60] sm:$0xff]
    %v762 = vld [vmem:[#allocation2 + $0x68] sm:$0xff]
    %v763 = vld [vmem:[#allocation2 + $0x70] sm:$0xff]
    %v764 = vld [vmem:[#allocation2 + $0x78] sm:$0xff]
    %v765 = vld [vmem:[#allocation2 + $0x80] sm:$0xff]
    %v766 = vld [vmem:[#allocation2 + $0x88] sm:$0xff]
    %v767 = vld [vmem:[#allocation2 + $0x90] sm:$0xff]
    %v768 = vld [vmem:[#allocation2 + $0x98] sm:$0xff]
    %v769 = vld [vmem:[#allocation2 + $0xa0] sm:$0xff]
    %v770 = vld [vmem:[#allocation2 + $0xa8] sm:$0xff]
    %v771 = vld [vmem:[#allocation2 + $0xb0] sm:$0xff]
    %v772 = vld [vmem:[#allocation2 + $0xb8] sm:$0xff]
    %v773 = vld [vmem:[#allocation2 + $0xc0] sm:$0xff]
    %v774 = vld [vmem:[#allocation2 + $0xc8] sm:$0xff]
    %v775 = vld [vmem:[#allocation2 + $0xd0] sm:$0xff]
    %v776 = vld [vmem:[#allocation2 + $0xd8] sm:$0xff]
    %v777 = vld [vmem:[#allocation2 + $0xe0] sm:$0xff]
    %v778 = vld [vmem:[#allocation2 + $0xe8] sm:$0xff]
    %v779 = vld [vmem:[#allocation2 + $0xf0] sm:$0xff]
    %v780 = vld [vmem:[#allocation2 + $0xf8] sm:$0xff]
    %v781 = vld [vmem:[#allocation2 + $0x100] sm:$0xff]
    %v782 = vld [vmem:[#allocation2 + $0x108] sm:$0xff]
    %v783 = vld [vmem:[#allocation2 + $0x110] sm:$0xff]
    %v784 = vld [vmem:[#allocation2 + $0x118] sm:$0xff]
    %v785 = vld [vmem:[#allocation2 + $0x120] sm:$0xff]
    %v786 = vld [vmem:[#allocation2 + $0x128] sm:$0xff]
    %v787 = vld [vmem:[#allocation2 + $0x130] sm:$0xff]
    %v788 = vld [vmem:[#allocation2 + $0x138] sm:$0xff]
    %v789 = vld [vmem:[#allocation2 + $0x140] sm:$0xff]
    %v790 = vld [vmem:[#allocation2 + $0x148] sm:$0xff]
    %v791 = vld [vmem:[#allocation2 + $0x150] sm:$0xff]
    %v792 = vld [vmem:[#allocation2 + $0x158] sm:$0xff]
    %v793 = vld [vmem:[#allocation2 + $0x160] sm:$0xff]
    %v794 = vld [vmem:[#allocation2 + $0x168] sm:$0xff]
    %v795 = vld [vmem:[#allocation2 + $0x170] sm:$0xff]
    %v796 = vld [vmem:[#allocation2 + $0x178] sm:$0xff]
    %v797 = vld [vmem:[#allocation2 + $0x180] sm:$0xff]
    %v798 = vld [vmem:[#allocation2 + $0x188] sm:$0xff]
    %v799 = vld [vmem:[#allocation2 + $0x190] sm:$0xff]
    %v800 = vld [vmem:[#allocation2 + $0x198] sm:$0xff]
    %v801 = vld [vmem:[#allocation2 + $0x1a0] sm:$0xff]
    %v802 = vld [vmem:[#allocation2 + $0x1a8] sm:$0xff]
    %v803 = vld [vmem:[#allocation2 + $0x1b0] sm:$0xff]
    %v804 = vld [vmem:[#allocation2 + $0x1b8] sm:$0xff]
    %v805 = vld [vmem:[#allocation2 + $0x1c0] sm:$0xff]
    %v806 = vld [vmem:[#allocation2 + $0x1c8] sm:$0xff]
    %v807 = vld [vmem:[#allocation2 + $0x1d0] sm:$0xff]
    %v808 = vld [vmem:[#allocation2 + $0x1d8] sm:$0xff]
    %v809 = vld [vmem:[#allocation2 + $0x1e0] sm:$0xff]
    %v810 = vld [vmem:[#allocation2 + $0x1e8] sm:$0xff]
    %v811 = vld [vmem:[#allocation2 + $0x1f0] sm:$0xff]
    %v812 = vld [vmem:[#allocation2 + $0x1f8] sm:$0xff]
    %v813 = vld [vmem:[#allocation2 + $0x200] sm:$0xff]
    %v814 = vld [vmem:[#allocation2 + $0x208] sm:$0xff]
    %v815 = vld [vmem:[#allocation2 + $0x210] sm:$0xff]
    %v816 = vld [vmem:[#allocation2 + $0x218] sm:$0xff]
    %v817 = vld [vmem:[#allocation2 + $0x220] sm:$0xff]
    %v818 = vld [vmem:[#allocation2 + $0x228] sm:$0xff]
    %v819 = vld [vmem:[#allocation2 + $0x230] sm:$0xff]
    %v820 = vld [vmem:[#allocation2 + $0x238] sm:$0xff]
    %v821 = vld [vmem:[#allocation2 + $0x240] sm:$0xff]
    %v822 = vld [vmem:[#allocation2 + $0x248] sm:$0xff]
    %v823 = vld [vmem:[#allocation2 + $0x250] sm:$0xff]
    %v824 = vld [vmem:[#allocation2 + $0x258] sm:$0xff]
    %v825 = vld [vmem:[#allocation2 + $0x260] sm:$0xff]
    %v826 = vld [vmem:[#allocation2 + $0x268] sm:$0xff]
    %v827 = vld [vmem:[#allocation2 + $0x270] sm:$0xff]
    %v828 = vld [vmem:[#allocation2 + $0x278] sm:$0xff]
    %v829 = vld [vmem:[#allocation2 + $0x280] sm:$0xff]
    %v830 = vld [vmem:[#allocation2 + $0x288] sm:$0xff]
    %v831 = vld [vmem:[#allocation2 + $0x290] sm:$0xff]
    %v832 = vld [vmem:[#allocation2 + $0x298] sm:$0xff]
    %v833 = vld [vmem:[#allocation2 + $0x2a0] sm:$0xff]
    %v834 = vld [vmem:[#allocation2 + $0x2a8] sm:$0xff]
    %v835 = vld [vmem:[#allocation2 + $0x2b0] sm:$0xff]
    %v836 = vld [vmem:[#allocation2 + $0x2b8] sm:$0xff]
    %v837 = vld [vmem:[#allocation2 + $0x2c0] sm:$0xff]
    %v838 = vld [vmem:[#allocation2 + $0x2c8] sm:$0xff]
    %v839 = vld [vmem:[#allocation2 + $0x2d0] sm:$0xff]
    %v840 = vld [vmem:[#allocation2 + $0x2d8] sm:$0xff]
    %v841 = vld [vmem:[#allocation2 + $0x2e0] sm:$0xff]
    %v842 = vld [vmem:[#allocation2 + $0x2e8] sm:$0xff]
    %v843 = vld [vmem:[#allocation2 + $0x2f0] sm:$0xff]
    %v844 = vld [vmem:[#allocation2 + $0x2f8] sm:$0xff]
    %v845 = vld [vmem:[#allocation2 + $0x300] sm:$0xff]
    %v846 = vld [vmem:[#allocation2 + $0x308] sm:$0xff]
    %v847 = vld [vmem:[#allocation2 + $0x310] sm:$0xff]
    %v848 = vld [vmem:[#allocation2 + $0x318] sm:$0xff]
    %v849 = vld [vmem:[#allocation2 + $0x320] sm:$0xff]
    %v850 = vld [vmem:[#allocation2 + $0x328] sm:$0xff]
    %v851 = vld [vmem:[#allocation2 + $0x330] sm:$0xff]
    %v852 = vld [vmem:[#allocation2 + $0x338] sm:$0xff]
    %v853 = vld [vmem:[#allocation2 + $0x340] sm:$0xff]
    %v854 = vld [vmem:[#allocation2 + $0x348] sm:$0xff]
    %v855 = vld [vmem:[#allocation2 + $0x350] sm:$0xff]
    %v856 = vld [vmem:[#allocation2 + $0x358] sm:$0xff]
    %v857 = vld [vmem:[#allocation2 + $0x360] sm:$0xff]
    %v858 = vld [vmem:[#allocation2 + $0x368] sm:$0xff]
    %v859 = vld [vmem:[#allocation2 + $0x370] sm:$0xff]
    %v860 = vld [vmem:[#allocation2 + $0x378] sm:$0xff]
    %v861 = vld [vmem:[#allocation2 + $0x380] sm:$0xff]
    %v862 = vld [vmem:[#allocation2 + $0x388] sm:$0xff]
    %v863 = vld [vmem:[#allocation2 + $0x390] sm:$0xff]
    %v864 = vld [vmem:[#allocation2 + $0x398] sm:$0xff]
    %v865 = vld [vmem:[#allocation2 + $0x3a0] sm:$0xff]
    %v866 = vld [vmem:[#allocation2 + $0x3a8] sm:$0xff]
    %v867 = vld [vmem:[#allocation2 + $0x3b0] sm:$0xff]
    %v868 = vld [vmem:[#allocation2 + $0x3b8] sm:$0xff]
    %v869 = vld [vmem:[#allocation2 + $0x3c0] sm:$0xff]
    %v870 = vld [vmem:[#allocation2 + $0x3c8] sm:$0xff]
    %v871 = vld [vmem:[#allocation2 + $0x3d0] sm:$0xff]
    %v872 = vld [vmem:[#allocation2 + $0x3d8] sm:$0xff]
    %v873 = vld [vmem:[#allocation2 + $0x3e0] sm:$0xff]
    %v874 = vld [vmem:[#allocation2 + $0x3e8] sm:$0xff]
    %v875 = vld [vmem:[#allocation2 + $0x3f0] sm:$0xff]
    %v876 = vld [vmem:[#allocation2 + $0x3f8] sm:$0xff]
    %v877 = vld [vmem:[#allocation2 + $0x400] sm:$0xff]
    %v878 = vld [vmem:[#allocation2 + $0x408] sm:$0xff]
    %v879 = vld [vmem:[#allocation2 + $0x410] sm:$0xff]
    %v880 = vld [vmem:[#allocation2 + $0x418] sm:$0xff]
    %v881 = vld [vmem:[#allocation2 + $0x420] sm:$0xff]
    %v882 = vld [vmem:[#allocation2 + $0x428] sm:$0xff]
    %v883 = vld [vmem:[#allocation2 + $0x430] sm:$0xff]
    %v884 = vld [vmem:[#allocation2 + $0x438] sm:$0xff]
    %v885 = vld [vmem:[#allocation2 + $0x440] sm:$0xff]
    %v886 = vld [vmem:[#allocation2 + $0x448] sm:$0xff]
    %v887 = vld [vmem:[#allocation2 + $0x450] sm:$0xff]
    %v888 = vld [vmem:[#allocation2 + $0x458] sm:$0xff]
    %v889 = vld [vmem:[#allocation2 + $0x460] sm:$0xff]
    %v890 = vld [vmem:[#allocation2 + $0x468] sm:$0xff]
    %v891 = vld [vmem:[#allocation2 + $0x470] sm:$0xff]
    %v892 = vld [vmem:[#allocation2 + $0x478] sm:$0xff]
    %v893 = vld [vmem:[#allocation2 + $0x480] sm:$0xff]
    %v894 = vld [vmem:[#allocation2 + $0x488] sm:$0xff]
    %v895 = vld [vmem:[#allocation2 + $0x490] sm:$0xff]
    %v896 = vld [vmem:[#allocation2 + $0x498] sm:$0xff]
    %v897 = vld [vmem:[#allocation2 + $0x4a0] sm:$0xff]
    %v898 = vld [vmem:[#allocation2 + $0x4a8] sm:$0xff]
    %v899 = vld [vmem:[#allocation2 + $0x4b0] sm:$0xff]
    %v900 = vld [vmem:[#allocation2 + $0x4b8] sm:$0xff]
    %v901 = vld [vmem:[#allocation2 + $0x4c0] sm:$0xff]
    %v902 = vld [vmem:[#allocation2 + $0x4c8] sm:$0xff]
    %v903 = vld [vmem:[#allocation2 + $0x4d0] sm:$0xff]
    %v904 = vld [vmem:[#allocation2 + $0x4d8] sm:$0xff]
    %v905 = vld [vmem:[#allocation2 + $0x4e0] sm:$0xff]
    %v906 = vld [vmem:[#allocation2 + $0x4e8] sm:$0xff]
    %v907 = vld [vmem:[#allocation2 + $0x4f0] sm:$0xff]
    %v908 = vld [vmem:[#allocation2 + $0x4f8] sm:$0xff]
    %v909 = vld [vmem:[#allocation2 + $0x500] sm:$0xff]
    %v910 = vld [vmem:[#allocation2 + $0x508] sm:$0xff]
    %v911 = vld [vmem:[#allocation2 + $0x510] sm:$0xff]
    %v912 = vld [vmem:[#allocation2 + $0x518] sm:$0xff]
    %v913 = vld [vmem:[#allocation2 + $0x520] sm:$0xff]
    %v914 = vld [vmem:[#allocation2 + $0x528] sm:$0xff]
    %v915 = vld [vmem:[#allocation2 + $0x530] sm:$0xff]
    %v916 = vld [vmem:[#allocation2 + $0x538] sm:$0xff]
    %v917 = vld [vmem:[#allocation2 + $0x540] sm:$0xff]
    %v918 = vld [vmem:[#allocation2 + $0x548] sm:$0xff]
    %v919 = vld [vmem:[#allocation2 + $0x550] sm:$0xff]
    %v920 = vld [vmem:[#allocation2 + $0x558] sm:$0xff]
    %v921 = vld [vmem:[#allocation2 + $0x560] sm:$0xff]
    %v922 = vld [vmem:[#allocation2 + $0x568] sm:$0xff]
    %v923 = vld [vmem:[#allocation2 + $0x570] sm:$0xff]
    %v924 = vld [vmem:[#allocation2 + $0x578] sm:$0xff]
    %v925 = vld [vmem:[#allocation2 + $0x580] sm:$0xff]
    %v926 = vld [vmem:[#allocation2 + $0x588] sm:$0xff]
    %v927 = vld [vmem:[#allocation2 + $0x590] sm:$0xff]
    %v928 = vld [vmem:[#allocation2 + $0x598] sm:$0xff]
    %v929 = vld [vmem:[#allocation2 + $0x5a0] sm:$0xff]
    %v930 = vld [vmem:[#allocation2 + $0x5a8] sm:$0xff]
    %v931 = vld [vmem:[#allocation2 + $0x5b0] sm:$0xff]
    %v932 = vld [vmem:[#allocation2 + $0x5b8] sm:$0xff]
    %v933 = vld [vmem:[#allocation2 + $0x5c0] sm:$0xff]
    %v934 = vld [vmem:[#allocation2 + $0x5c8] sm:$0xff]
    %v935 = vld [vmem:[#allocation2 + $0x5d0] sm:$0xff]
    %v936 = vld [vmem:[#allocation2 + $0x5d8] sm:$0xff]
    %v937 = vld [vmem:[#allocation2 + $0x5e0] sm:$0xff]
    %v938 = vld [vmem:[#allocation2 + $0x5e8] sm:$0xff]
    %v939 = vld [vmem:[#allocation2 + $0x5f0] sm:$0xff]
    %v940 = vld [vmem:[#allocation2 + $0x5f8] sm:$0xff]
    %v941 = vld [vmem:[#allocation2 + $0x600] sm:$0xff]
    %v942 = vld [vmem:[#allocation2 + $0x608] sm:$0xff]
    %v943 = vld [vmem:[#allocation2 + $0x610] sm:$0xff]
    %v944 = vld [vmem:[#allocation2 + $0x618] sm:$0xff]
    %v945 = vld [vmem:[#allocation2 + $0x620] sm:$0xff]
    %v946 = vld [vmem:[#allocation2 + $0x628] sm:$0xff]
    %v947 = vld [vmem:[#allocation2 + $0x630] sm:$0xff]
    %v948 = vld [vmem:[#allocation2 + $0x638] sm:$0xff]
    %v949 = vld [vmem:[#allocation2 + $0x640] sm:$0xff]
    %v950 = vld [vmem:[#allocation2 + $0x648] sm:$0xff]
    %v951 = vld [vmem:[#allocation2 + $0x650] sm:$0xff]
    %v952 = vld [vmem:[#allocation2 + $0x658] sm:$0xff]
    %v953 = vld [vmem:[#allocation2 + $0x660] sm:$0xff]
    %v954 = vld [vmem:[#allocation2 + $0x668] sm:$0xff]
    %v955 = vld [vmem:[#allocation2 + $0x670] sm:$0xff]
    %v956 = vld [vmem:[#allocation2 + $0x678] sm:$0xff]
    %v957 = vld [vmem:[#allocation2 + $0x680] sm:$0xff]
    %v958 = vld [vmem:[#allocation2 + $0x688] sm:$0xff]
    %v959 = vld [vmem:[#allocation2 + $0x690] sm:$0xff]
    %v960 = vld [vmem:[#allocation2 + $0x698] sm:$0xff]
    %v961 = vld [vmem:[#allocation2 + $0x6a0] sm:$0xff]
    %v962 = vld [vmem:[#allocation2 + $0x6a8] sm:$0xff]
    %v963 = vld [vmem:[#allocation2 + $0x6b0] sm:$0xff]
    %v964 = vld [vmem:[#allocation2 + $0x6b8] sm:$0xff]
    %v965 = vld [vmem:[#allocation2 + $0x6c0] sm:$0xff]
    %v966 = vld [vmem:[#allocation2 + $0x6c8] sm:$0xff]
    %v967 = vld [vmem:[#allocation2 + $0x6d0] sm:$0xff]
    %v968 = vld [vmem:[#allocation2 + $0x6d8] sm:$0xff]
    %v969 = vld [vmem:[#allocation2 + $0x6e0] sm:$0xff]
    %v970 = vld [vmem:[#allocation2 + $0x6e8] sm:$0xff]
    %v971 = vld [vmem:[#allocation2 + $0x6f0] sm:$0xff]
    %v972 = vld [vmem:[#allocation2 + $0x6f8] sm:$0xff]
    %v973 = vld [vmem:[#allocation2 + $0x700] sm:$0xff]
    %v974 = vld [vmem:[#allocation2 + $0x708] sm:$0xff]
    %v975 = vld [vmem:[#allocation2 + $0x710] sm:$0xff]
    %v976 = vld [vmem:[#allocation2 + $0x718] sm:$0xff]
    %v977 = vld [vmem:[#allocation2 + $0x720] sm:$0xff]
    %v978 = vld [vmem:[#allocation2 + $0x728] sm:$0xff]
    %v979 = vld [vmem:[#allocation2 + $0x730] sm:$0xff]
    %v980 = vld [vmem:[#allocation2 + $0x738] sm:$0xff]
    %v981 = vld [vmem:[#allocation2 + $0x740] sm:$0xff]
    %v982 = vld [vmem:[#allocation2 + $0x748] sm:$0xff]
    %v983 = vld [vmem:[#allocation2 + $0x750] sm:$0xff]
    %v984 = vld [vmem:[#allocation2 + $0x758] sm:$0xff]
    %v985 = vld [vmem:[#allocation2 + $0x760] sm:$0xff]
    %v986 = vld [vmem:[#allocation2 + $0x768] sm:$0xff]
    %v987 = vld [vmem:[#allocation2 + $0x770] sm:$0xff]
    %v988 = vld [vmem:[#allocation2 + $0x778] sm:$0xff]
    %v989 = vld [vmem:[#allocation2 + $0x780] sm:$0xff]
    %v990 = vld [vmem:[#allocation2 + $0x788] sm:$0xff]
    %v991 = vld [vmem:[#allocation2 + $0x790] sm:$0xff]
    %v992 = vld [vmem:[#allocation2 + $0x798] sm:$0xff]
    %v993 = vld [vmem:[#allocation2 + $0x7a0] sm:$0xff]
    %v994 = vld [vmem:[#allocation2 + $0x7a8] sm:$0xff]
    %v995 = vld [vmem:[#allocation2 + $0x7b0] sm:$0xff]
    %v996 = vld [vmem:[#allocation2 + $0x7b8] sm:$0xff]
    %v997 = vld [vmem:[#allocation2 + $0x7c0] sm:$0xff]
    %v998 = vld [vmem:[#allocation2 + $0x7c8] sm:$0xff]
    %v999 = vld [vmem:[#allocation2 + $0x7d0] sm:$0xff]
    %v1000 = vld [vmem:[#allocation2 + $0x7d8] sm:$0xff]
    %v1001 = vld [vmem:[#allocation2 + $0x7e0] sm:$0xff]
    %v1002 = vld [vmem:[#allocation2 + $0x7e8] sm:$0xff]
    %v1003 = vld [vmem:[#allocation2 + $0x7f0] sm:$0xff]
    %v1004 = vld [vmem:[#allocation2 + $0x7f8] sm:$0xff]
    %v1005 = vld [vmem:[%s6] sm:$0xf]
    %v1007 = vlaneseq
    %v1008 = vshrl.u32 %v1007, 7
    %v1009 = vsub.s32 0, %v1008
    %v1010 = vrot.slane %v1005, %v1009
    %v1011 = vlaneseq
    %v1012 = vshrl.u32 %v1011, 7
    %v1013 = vsub.s32 1, %v1012
    %v1014 = vrot.slane %v1005, %v1013
    %v1015 = vlaneseq
    %v1016 = vshrl.u32 %v1015, 7
    %v1017 = vsub.s32 2, %v1016
    %v1018 = vrot.slane %v1005, %v1017
    %v1019 = vlaneseq
    %v1020 = vshrl.u32 %v1019, 7
    %v1021 = vsub.s32 3, %v1020
    %v1022 = vrot.slane %v1005, %v1021
    %v1283 = vunpack.c.l.b16 %v749
    %v1284 = vunpack.c.h.b16 %v749
    %v1285 = vunpack.c.l.b16 %v750
    %v1286 = vunpack.c.h.b16 %v750
    %v1287 = vunpack.c.l.b16 %v751
    %v1288 = vunpack.c.h.b16 %v751
    %v1289 = vunpack.c.l.b16 %v752
    %v1290 = vunpack.c.h.b16 %v752
    %v1291 = vunpack.c.l.b16 %v753
    %v1292 = vunpack.c.h.b16 %v753
    %v1293 = vunpack.c.l.b16 %v754
    %v1294 = vunpack.c.h.b16 %v754
    %v1295 = vunpack.c.l.b16 %v755
    %v1296 = vunpack.c.h.b16 %v755
    %v1297 = vunpack.c.l.b16 %v756
    %v1298 = vunpack.c.h.b16 %v756
    %v1299 = vunpack.c.l.b16 %v757
    %v1300 = vunpack.c.h.b16 %v757
    %v1301 = vunpack.c.l.b16 %v758
    %v1302 = vunpack.c.h.b16 %v758
    %v1303 = vunpack.c.l.b16 %v759
    %v1304 = vunpack.c.h.b16 %v759
    %v1305 = vunpack.c.l.b16 %v760
    %v1306 = vunpack.c.h.b16 %v760
    %v1307 = vunpack.c.l.b16 %v761
    %v1308 = vunpack.c.h.b16 %v761
    %v1309 = vunpack.c.l.b16 %v762
    %v1310 = vunpack.c.h.b16 %v762
    %v1311 = vunpack.c.l.b16 %v763
    %v1312 = vunpack.c.h.b16 %v763
    %v1313 = vunpack.c.l.b16 %v764
    %v1314 = vunpack.c.h.b16 %v764
    %v1315 = vunpack.c.l.b16 %v765
    %v1316 = vunpack.c.h.b16 %v765
    %v1317 = vunpack.c.l.b16 %v766
    %v1318 = vunpack.c.h.b16 %v766
    %v1319 = vunpack.c.l.b16 %v767
    %v1320 = vunpack.c.h.b16 %v767
    %v1321 = vunpack.c.l.b16 %v768
    %v1322 = vunpack.c.h.b16 %v768
    %v1323 = vunpack.c.l.b16 %v769
    %v1324 = vunpack.c.h.b16 %v769
    %v1325 = vunpack.c.l.b16 %v770
    %v1326 = vunpack.c.h.b16 %v770
    %v1327 = vunpack.c.l.b16 %v771
    %v1328 = vunpack.c.h.b16 %v771
    %v1329 = vunpack.c.l.b16 %v772
    %v1330 = vunpack.c.h.b16 %v772
    %v1331 = vunpack.c.l.b16 %v773
    %v1332 = vunpack.c.h.b16 %v773
    %v1333 = vunpack.c.l.b16 %v774
    %v1334 = vunpack.c.h.b16 %v774
    %v1335 = vunpack.c.l.b16 %v775
    %v1336 = vunpack.c.h.b16 %v775
    %v1337 = vunpack.c.l.b16 %v776
    %v1338 = vunpack.c.h.b16 %v776
    %v1339 = vunpack.c.l.b16 %v777
    %v1340 = vunpack.c.h.b16 %v777
    %v1341 = vunpack.c.l.b16 %v778
    %v1342 = vunpack.c.h.b16 %v778
    %v1343 = vunpack.c.l.b16 %v779
    %v1344 = vunpack.c.h.b16 %v779
    %v1345 = vunpack.c.l.b16 %v780
    %v1346 = vunpack.c.h.b16 %v780
    %v1347 = vunpack.c.l.b16 %v781
    %v1348 = vunpack.c.h.b16 %v781
    %v1349 = vunpack.c.l.b16 %v782
    %v1350 = vunpack.c.h.b16 %v782
    %v1351 = vunpack.c.l.b16 %v783
    %v1352 = vunpack.c.h.b16 %v783
    %v1353 = vunpack.c.l.b16 %v784
    %v1354 = vunpack.c.h.b16 %v784
    %v1355 = vunpack.c.l.b16 %v785
    %v1356 = vunpack.c.h.b16 %v785
    %v1357 = vunpack.c.l.b16 %v786
    %v1358 = vunpack.c.h.b16 %v786
    %v1359 = vunpack.c.l.b16 %v787
    %v1360 = vunpack.c.h.b16 %v787
    %v1361 = vunpack.c.l.b16 %v788
    %v1362 = vunpack.c.h.b16 %v788
    %v1363 = vunpack.c.l.b16 %v789
    %v1364 = vunpack.c.h.b16 %v789
    %v1365 = vunpack.c.l.b16 %v790
    %v1366 = vunpack.c.h.b16 %v790
    %v1367 = vunpack.c.l.b16 %v791
    %v1368 = vunpack.c.h.b16 %v791
    %v1369 = vunpack.c.l.b16 %v792
    %v1370 = vunpack.c.h.b16 %v792
    %v1371 = vunpack.c.l.b16 %v793
    %v1372 = vunpack.c.h.b16 %v793
    %v1373 = vunpack.c.l.b16 %v794
    %v1374 = vunpack.c.h.b16 %v794
    %v1375 = vunpack.c.l.b16 %v795
    %v1376 = vunpack.c.h.b16 %v795
    %v1377 = vunpack.c.l.b16 %v796
    %v1378 = vunpack.c.h.b16 %v796
    %v1379 = vunpack.c.l.b16 %v797
    %v1380 = vunpack.c.h.b16 %v797
    %v1381 = vunpack.c.l.b16 %v798
    %v1382 = vunpack.c.h.b16 %v798
    %v1383 = vunpack.c.l.b16 %v799
    %v1384 = vunpack.c.h.b16 %v799
    %v1385 = vunpack.c.l.b16 %v800
    %v1386 = vunpack.c.h.b16 %v800
    %v1387 = vunpack.c.l.b16 %v801
    %v1388 = vunpack.c.h.b16 %v801
    %v1389 = vunpack.c.l.b16 %v802
    %v1390 = vunpack.c.h.b16 %v802
    %v1391 = vunpack.c.l.b16 %v803
    %v1392 = vunpack.c.h.b16 %v803
    %v1393 = vunpack.c.l.b16 %v804
    %v1394 = vunpack.c.h.b16 %v804
    %v1395 = vunpack.c.l.b16 %v805
    %v1396 = vunpack.c.h.b16 %v805
    %v1397 = vunpack.c.l.b16 %v806
    %v1398 = vunpack.c.h.b16 %v806
    %v1399 = vunpack.c.l.b16 %v807
    %v1400 = vunpack.c.h.b16 %v807
    %v1401 = vunpack.c.l.b16 %v808
    %v1402 = vunpack.c.h.b16 %v808
    %v1403 = vunpack.c.l.b16 %v809
    %v1404 = vunpack.c.h.b16 %v809
    %v1405 = vunpack.c.l.b16 %v810
    %v1406 = vunpack.c.h.b16 %v810
    %v1407 = vunpack.c.l.b16 %v811
    %v1408 = vunpack.c.h.b16 %v811
    %v1409 = vunpack.c.l.b16 %v812
    %v1410 = vunpack.c.h.b16 %v812
    %v1411 = vunpack.c.l.b16 %v813
    %v1412 = vunpack.c.h.b16 %v813
    %v1413 = vunpack.c.l.b16 %v814
    %v1414 = vunpack.c.h.b16 %v814
    %v1415 = vunpack.c.l.b16 %v815
    %v1416 = vunpack.c.h.b16 %v815
    %v1417 = vunpack.c.l.b16 %v816
    %v1418 = vunpack.c.h.b16 %v816
    %v1419 = vunpack.c.l.b16 %v817
    %v1420 = vunpack.c.h.b16 %v817
    %v1421 = vunpack.c.l.b16 %v818
    %v1422 = vunpack.c.h.b16 %v818
    %v1423 = vunpack.c.l.b16 %v819
    %v1424 = vunpack.c.h.b16 %v819
    %v1425 = vunpack.c.l.b16 %v820
    %v1426 = vunpack.c.h.b16 %v820
    %v1427 = vunpack.c.l.b16 %v821
    %v1428 = vunpack.c.h.b16 %v821
    %v1429 = vunpack.c.l.b16 %v822
    %v1430 = vunpack.c.h.b16 %v822
    %v1431 = vunpack.c.l.b16 %v823
    %v1432 = vunpack.c.h.b16 %v823
    %v1433 = vunpack.c.l.b16 %v824
    %v1434 = vunpack.c.h.b16 %v824
    %v1435 = vunpack.c.l.b16 %v825
    %v1436 = vunpack.c.h.b16 %v825
    %v1437 = vunpack.c.l.b16 %v826
    %v1438 = vunpack.c.h.b16 %v826
    %v1439 = vunpack.c.l.b16 %v827
    %v1440 = vunpack.c.h.b16 %v827
    %v1441 = vunpack.c.l.b16 %v828
    %v1442 = vunpack.c.h.b16 %v828
    %v1443 = vunpack.c.l.b16 %v829
    %v1444 = vunpack.c.h.b16 %v829
    %v1445 = vunpack.c.l.b16 %v830
    %v1446 = vunpack.c.h.b16 %v830
    %v1447 = vunpack.c.l.b16 %v831
    %v1448 = vunpack.c.h.b16 %v831
    %v1449 = vunpack.c.l.b16 %v832
    %v1450 = vunpack.c.h.b16 %v832
    %v1451 = vunpack.c.l.b16 %v833
    %v1452 = vunpack.c.h.b16 %v833
    %v1453 = vunpack.c.l.b16 %v834
    %v1454 = vunpack.c.h.b16 %v834
    %v1455 = vunpack.c.l.b16 %v835
    %v1456 = vunpack.c.h.b16 %v835
    %v1457 = vunpack.c.l.b16 %v836
    %v1458 = vunpack.c.h.b16 %v836
    %v1459 = vunpack.c.l.b16 %v837
    %v1460 = vunpack.c.h.b16 %v837
    %v1461 = vunpack.c.l.b16 %v838
    %v1462 = vunpack.c.h.b16 %v838
    %v1463 = vunpack.c.l.b16 %v839
    %v1464 = vunpack.c.h.b16 %v839
    %v1465 = vunpack.c.l.b16 %v840
    %v1466 = vunpack.c.h.b16 %v840
    %v1467 = vunpack.c.l.b16 %v841
    %v1468 = vunpack.c.h.b16 %v841
    %v1469 = vunpack.c.l.b16 %v842
    %v1470 = vunpack.c.h.b16 %v842
    %v1471 = vunpack.c.l.b16 %v843
    %v1472 = vunpack.c.h.b16 %v843
    %v1473 = vunpack.c.l.b16 %v844
    %v1474 = vunpack.c.h.b16 %v844
    %v1475 = vunpack.c.l.b16 %v845
    %v1476 = vunpack.c.h.b16 %v845
    %v1477 = vunpack.c.l.b16 %v846
    %v1478 = vunpack.c.h.b16 %v846
    %v1479 = vunpack.c.l.b16 %v847
    %v1480 = vunpack.c.h.b16 %v847
    %v1481 = vunpack.c.l.b16 %v848
    %v1482 = vunpack.c.h.b16 %v848
    %v1483 = vunpack.c.l.b16 %v849
    %v1484 = vunpack.c.h.b16 %v849
    %v1485 = vunpack.c.l.b16 %v850
    %v1486 = vunpack.c.h.b16 %v850
    %v1487 = vunpack.c.l.b16 %v851
    %v1488 = vunpack.c.h.b16 %v851
    %v1489 = vunpack.c.l.b16 %v852
    %v1490 = vunpack.c.h.b16 %v852
    %v1491 = vunpack.c.l.b16 %v853
    %v1492 = vunpack.c.h.b16 %v853
    %v1493 = vunpack.c.l.b16 %v854
    %v1494 = vunpack.c.h.b16 %v854
    %v1495 = vunpack.c.l.b16 %v855
    %v1496 = vunpack.c.h.b16 %v855
    %v1497 = vunpack.c.l.b16 %v856
    %v1498 = vunpack.c.h.b16 %v856
    %v1499 = vunpack.c.l.b16 %v857
    %v1500 = vunpack.c.h.b16 %v857
    %v1501 = vunpack.c.l.b16 %v858
    %v1502 = vunpack.c.h.b16 %v858
    %v1503 = vunpack.c.l.b16 %v859
    %v1504 = vunpack.c.h.b16 %v859
    %v1505 = vunpack.c.l.b16 %v860
    %v1506 = vunpack.c.h.b16 %v860
    %v1507 = vunpack.c.l.b16 %v861
    %v1508 = vunpack.c.h.b16 %v861
    %v1509 = vunpack.c.l.b16 %v862
    %v1510 = vunpack.c.h.b16 %v862
    %v1511 = vunpack.c.l.b16 %v863
    %v1512 = vunpack.c.h.b16 %v863
    %v1513 = vunpack.c.l.b16 %v864
    %v1514 = vunpack.c.h.b16 %v864
    %v1515 = vunpack.c.l.b16 %v865
    %v1516 = vunpack.c.h.b16 %v865
    %v1517 = vunpack.c.l.b16 %v866
    %v1518 = vunpack.c.h.b16 %v866
    %v1519 = vunpack.c.l.b16 %v867
    %v1520 = vunpack.c.h.b16 %v867
    %v1521 = vunpack.c.l.b16 %v868
    %v1522 = vunpack.c.h.b16 %v868
    %v1523 = vunpack.c.l.b16 %v869
    %v1524 = vunpack.c.h.b16 %v869
    %v1525 = vunpack.c.l.b16 %v870
    %v1526 = vunpack.c.h.b16 %v870
    %v1527 = vunpack.c.l.b16 %v871
    %v1528 = vunpack.c.h.b16 %v871
    %v1529 = vunpack.c.l.b16 %v872
    %v1530 = vunpack.c.h.b16 %v872
    %v1531 = vunpack.c.l.b16 %v873
    %v1532 = vunpack.c.h.b16 %v873
    %v1533 = vunpack.c.l.b16 %v874
    %v1534 = vunpack.c.h.b16 %v874
    %v1535 = vunpack.c.l.b16 %v875
    %v1536 = vunpack.c.h.b16 %v875
    %v1537 = vunpack.c.l.b16 %v876
    %v1538 = vunpack.c.h.b16 %v876
    %v1539 = vunpack.c.l.b16 %v877
    %v1540 = vunpack.c.h.b16 %v877
    %v1541 = vunpack.c.l.b16 %v878
    %v1542 = vunpack.c.h.b16 %v878
    %v1543 = vunpack.c.l.b16 %v879
    %v1544 = vunpack.c.h.b16 %v879
    %v1545 = vunpack.c.l.b16 %v880
    %v1546 = vunpack.c.h.b16 %v880
    %v1547 = vunpack.c.l.b16 %v881
    %v1548 = vunpack.c.h.b16 %v881
    %v1549 = vunpack.c.l.b16 %v882
    %v1550 = vunpack.c.h.b16 %v882
    %v1551 = vunpack.c.l.b16 %v883
    %v1552 = vunpack.c.h.b16 %v883
    %v1553 = vunpack.c.l.b16 %v884
    %v1554 = vunpack.c.h.b16 %v884
    %v1555 = vunpack.c.l.b16 %v885
    %v1556 = vunpack.c.h.b16 %v885
    %v1557 = vunpack.c.l.b16 %v886
    %v1558 = vunpack.c.h.b16 %v886
    %v1559 = vunpack.c.l.b16 %v887
    %v1560 = vunpack.c.h.b16 %v887
    %v1561 = vunpack.c.l.b16 %v888
    %v1562 = vunpack.c.h.b16 %v888
    %v1563 = vunpack.c.l.b16 %v889
    %v1564 = vunpack.c.h.b16 %v889
    %v1565 = vunpack.c.l.b16 %v890
    %v1566 = vunpack.c.h.b16 %v890
    %v1567 = vunpack.c.l.b16 %v891
    %v1568 = vunpack.c.h.b16 %v891
    %v1569 = vunpack.c.l.b16 %v892
    %v1570 = vunpack.c.h.b16 %v892
    %v1571 = vunpack.c.l.b16 %v893
    %v1572 = vunpack.c.h.b16 %v893
    %v1573 = vunpack.c.l.b16 %v894
    %v1574 = vunpack.c.h.b16 %v894
    %v1575 = vunpack.c.l.b16 %v895
    %v1576 = vunpack.c.h.b16 %v895
    %v1577 = vunpack.c.l.b16 %v896
    %v1578 = vunpack.c.h.b16 %v896
    %v1579 = vunpack.c.l.b16 %v897
    %v1580 = vunpack.c.h.b16 %v897
    %v1581 = vunpack.c.l.b16 %v898
    %v1582 = vunpack.c.h.b16 %v898
    %v1583 = vunpack.c.l.b16 %v899
    %v1584 = vunpack.c.h.b16 %v899
    %v1585 = vunpack.c.l.b16 %v900
    %v1586 = vunpack.c.h.b16 %v900
    %v1587 = vunpack.c.l.b16 %v901
    %v1588 = vunpack.c.h.b16 %v901
    %v1589 = vunpack.c.l.b16 %v902
    %v1590 = vunpack.c.h.b16 %v902
    %v1591 = vunpack.c.l.b16 %v903
    %v1592 = vunpack.c.h.b16 %v903
    %v1593 = vunpack.c.l.b16 %v904
    %v1594 = vunpack.c.h.b16 %v904
    %v1595 = vunpack.c.l.b16 %v905
    %v1596 = vunpack.c.h.b16 %v905
    %v1597 = vunpack.c.l.b16 %v906
    %v1598 = vunpack.c.h.b16 %v906
    %v1599 = vunpack.c.l.b16 %v907
    %v1600 = vunpack.c.h.b16 %v907
    %v1601 = vunpack.c.l.b16 %v908
    %v1602 = vunpack.c.h.b16 %v908
    %v1603 = vunpack.c.l.b16 %v909
    %v1604 = vunpack.c.h.b16 %v909
    %v1605 = vunpack.c.l.b16 %v910
    %v1606 = vunpack.c.h.b16 %v910
    %v1607 = vunpack.c.l.b16 %v911
    %v1608 = vunpack.c.h.b16 %v911
    %v1609 = vunpack.c.l.b16 %v912
    %v1610 = vunpack.c.h.b16 %v912
    %v1611 = vunpack.c.l.b16 %v913
    %v1612 = vunpack.c.h.b16 %v913
    %v1613 = vunpack.c.l.b16 %v914
    %v1614 = vunpack.c.h.b16 %v914
    %v1615 = vunpack.c.l.b16 %v915
    %v1616 = vunpack.c.h.b16 %v915
    %v1617 = vunpack.c.l.b16 %v916
    %v1618 = vunpack.c.h.b16 %v916
    %v1619 = vunpack.c.l.b16 %v917
    %v1620 = vunpack.c.h.b16 %v917
    %v1621 = vunpack.c.l.b16 %v918
    %v1622 = vunpack.c.h.b16 %v918
    %v1623 = vunpack.c.l.b16 %v919
    %v1624 = vunpack.c.h.b16 %v919
    %v1625 = vunpack.c.l.b16 %v920
    %v1626 = vunpack.c.h.b16 %v920
    %v1627 = vunpack.c.l.b16 %v921
    %v1628 = vunpack.c.h.b16 %v921
    %v1629 = vunpack.c.l.b16 %v922
    %v1630 = vunpack.c.h.b16 %v922
    %v1631 = vunpack.c.l.b16 %v923
    %v1632 = vunpack.c.h.b16 %v923
    %v1633 = vunpack.c.l.b16 %v924
    %v1634 = vunpack.c.h.b16 %v924
    %v1635 = vunpack.c.l.b16 %v925
    %v1636 = vunpack.c.h.b16 %v925
    %v1637 = vunpack.c.l.b16 %v926
    %v1638 = vunpack.c.h.b16 %v926
    %v1639 = vunpack.c.l.b16 %v927
    %v1640 = vunpack.c.h.b16 %v927
    %v1641 = vunpack.c.l.b16 %v928
    %v1642 = vunpack.c.h.b16 %v928
    %v1643 = vunpack.c.l.b16 %v929
    %v1644 = vunpack.c.h.b16 %v929
    %v1645 = vunpack.c.l.b16 %v930
    %v1646 = vunpack.c.h.b16 %v930
    %v1647 = vunpack.c.l.b16 %v931
    %v1648 = vunpack.c.h.b16 %v931
    %v1649 = vunpack.c.l.b16 %v932
    %v1650 = vunpack.c.h.b16 %v932
    %v1651 = vunpack.c.l.b16 %v933
    %v1652 = vunpack.c.h.b16 %v933
    %v1653 = vunpack.c.l.b16 %v934
    %v1654 = vunpack.c.h.b16 %v934
    %v1655 = vunpack.c.l.b16 %v935
    %v1656 = vunpack.c.h.b16 %v935
    %v1657 = vunpack.c.l.b16 %v936
    %v1658 = vunpack.c.h.b16 %v936
    %v1659 = vunpack.c.l.b16 %v937
    %v1660 = vunpack.c.h.b16 %v937
    %v1661 = vunpack.c.l.b16 %v938
    %v1662 = vunpack.c.h.b16 %v938
    %v1663 = vunpack.c.l.b16 %v939
    %v1664 = vunpack.c.h.b16 %v939
    %v1665 = vunpack.c.l.b16 %v940
    %v1666 = vunpack.c.h.b16 %v940
    %v1667 = vunpack.c.l.b16 %v941
    %v1668 = vunpack.c.h.b16 %v941
    %v1669 = vunpack.c.l.b16 %v942
    %v1670 = vunpack.c.h.b16 %v942
    %v1671 = vunpack.c.l.b16 %v943
    %v1672 = vunpack.c.h.b16 %v943
    %v1673 = vunpack.c.l.b16 %v944
    %v1674 = vunpack.c.h.b16 %v944
    %v1675 = vunpack.c.l.b16 %v945
    %v1676 = vunpack.c.h.b16 %v945
    %v1677 = vunpack.c.l.b16 %v946
    %v1678 = vunpack.c.h.b16 %v946
    %v1679 = vunpack.c.l.b16 %v947
    %v1680 = vunpack.c.h.b16 %v947
    %v1681 = vunpack.c.l.b16 %v948
    %v1682 = vunpack.c.h.b16 %v948
    %v1683 = vunpack.c.l.b16 %v949
    %v1684 = vunpack.c.h.b16 %v949
    %v1685 = vunpack.c.l.b16 %v950
    %v1686 = vunpack.c.h.b16 %v950
    %v1687 = vunpack.c.l.b16 %v951
    %v1688 = vunpack.c.h.b16 %v951
    %v1689 = vunpack.c.l.b16 %v952
    %v1690 = vunpack.c.h.b16 %v952
    %v1691 = vunpack.c.l.b16 %v953
    %v1692 = vunpack.c.h.b16 %v953
    %v1693 = vunpack.c.l.b16 %v954
    %v1694 = vunpack.c.h.b16 %v954
    %v1695 = vunpack.c.l.b16 %v955
    %v1696 = vunpack.c.h.b16 %v955
    %v1697 = vunpack.c.l.b16 %v956
    %v1698 = vunpack.c.h.b16 %v956
    %v1699 = vunpack.c.l.b16 %v957
    %v1700 = vunpack.c.h.b16 %v957
    %v1701 = vunpack.c.l.b16 %v958
    %v1702 = vunpack.c.h.b16 %v958
    %v1703 = vunpack.c.l.b16 %v959
    %v1704 = vunpack.c.h.b16 %v959
    %v1705 = vunpack.c.l.b16 %v960
    %v1706 = vunpack.c.h.b16 %v960
    %v1707 = vunpack.c.l.b16 %v961
    %v1708 = vunpack.c.h.b16 %v961
    %v1709 = vunpack.c.l.b16 %v962
    %v1710 = vunpack.c.h.b16 %v962
    %v1711 = vunpack.c.l.b16 %v963
    %v1712 = vunpack.c.h.b16 %v963
    %v1713 = vunpack.c.l.b16 %v964
    %v1714 = vunpack.c.h.b16 %v964
    %v1715 = vunpack.c.l.b16 %v965
    %v1716 = vunpack.c.h.b16 %v965
    %v1717 = vunpack.c.l.b16 %v966
    %v1718 = vunpack.c.h.b16 %v966
    %v1719 = vunpack.c.l.b16 %v967
    %v1720 = vunpack.c.h.b16 %v967
    %v1721 = vunpack.c.l.b16 %v968
    %v1722 = vunpack.c.h.b16 %v968
    %v1723 = vunpack.c.l.b16 %v969
    %v1724 = vunpack.c.h.b16 %v969
    %v1725 = vunpack.c.l.b16 %v970
    %v1726 = vunpack.c.h.b16 %v970
    %v1727 = vunpack.c.l.b16 %v971
    %v1728 = vunpack.c.h.b16 %v971
    %v1729 = vunpack.c.l.b16 %v972
    %v1730 = vunpack.c.h.b16 %v972
    %v1731 = vunpack.c.l.b16 %v973
    %v1732 = vunpack.c.h.b16 %v973
    %v1733 = vunpack.c.l.b16 %v974
    %v1734 = vunpack.c.h.b16 %v974
    %v1735 = vunpack.c.l.b16 %v975
    %v1736 = vunpack.c.h.b16 %v975
    %v1737 = vunpack.c.l.b16 %v976
    %v1738 = vunpack.c.h.b16 %v976
    %v1739 = vunpack.c.l.b16 %v977
    %v1740 = vunpack.c.h.b16 %v977
    %v1741 = vunpack.c.l.b16 %v978
    %v1742 = vunpack.c.h.b16 %v978
    %v1743 = vunpack.c.l.b16 %v979
    %v1744 = vunpack.c.h.b16 %v979
    %v1745 = vunpack.c.l.b16 %v980
    %v1746 = vunpack.c.h.b16 %v980
    %v1747 = vunpack.c.l.b16 %v981
    %v1748 = vunpack.c.h.b16 %v981
    %v1749 = vunpack.c.l.b16 %v982
    %v1750 = vunpack.c.h.b16 %v982
    %v1751 = vunpack.c.l.b16 %v983
    %v1752 = vunpack.c.h.b16 %v983
    %v1753 = vunpack.c.l.b16 %v984
    %v1754 = vunpack.c.h.b16 %v984
    %v1755 = vunpack.c.l.b16 %v985
    %v1756 = vunpack.c.h.b16 %v985
    %v1757 = vunpack.c.l.b16 %v986
    %v1758 = vunpack.c.h.b16 %v986
    %v1759 = vunpack.c.l.b16 %v987
    %v1760 = vunpack.c.h.b16 %v987
    %v1761 = vunpack.c.l.b16 %v988
    %v1762 = vunpack.c.h.b16 %v988
    %v1763 = vunpack.c.l.b16 %v989
    %v1764 = vunpack.c.h.b16 %v989
    %v1765 = vunpack.c.l.b16 %v990
    %v1766 = vunpack.c.h.b16 %v990
    %v1767 = vunpack.c.l.b16 %v991
    %v1768 = vunpack.c.h.b16 %v991
    %v1769 = vunpack.c.l.b16 %v992
    %v1770 = vunpack.c.h.b16 %v992
    %v1771 = vunpack.c.l.b16 %v993
    %v1772 = vunpack.c.h.b16 %v993
    %v1773 = vunpack.c.l.b16 %v994
    %v1774 = vunpack.c.h.b16 %v994
    %v1775 = vunpack.c.l.b16 %v995
    %v1776 = vunpack.c.h.b16 %v995
    %v1777 = vunpack.c.l.b16 %v996
    %v1778 = vunpack.c.h.b16 %v996
    %v1779 = vunpack.c.l.b16 %v997
    %v1780 = vunpack.c.h.b16 %v997
    %v1781 = vunpack.c.l.b16 %v998
    %v1782 = vunpack.c.h.b16 %v998
    %v1783 = vunpack.c.l.b16 %v999
    %v1784 = vunpack.c.h.b16 %v999
    %v1785 = vunpack.c.l.b16 %v1000
    %v1786 = vunpack.c.h.b16 %v1000
    %v1787 = vunpack.c.l.b16 %v1001
    %v1788 = vunpack.c.h.b16 %v1001
    %v1789 = vunpack.c.l.b16 %v1002
    %v1790 = vunpack.c.h.b16 %v1002
    %v1791 = vunpack.c.l.b16 %v1003
    %v1792 = vunpack.c.h.b16 %v1003
    %v1793 = vunpack.c.l.b16 %v1004
    %v1794 = vunpack.c.h.b16 %v1004
    %v1795 = vpack.c.b16 %v1287, %v1283
    %v1796 = vpack.c.b16 %v1288, %v1284
    %v1797 = vpack.c.b16 %v1289, %v1285
    %v1798 = vpack.c.b16 %v1290, %v1286
    %v1799 = vpack.c.b16 %v1295, %v1291
    %v1800 = vpack.c.b16 %v1296, %v1292
    %v1801 = vpack.c.b16 %v1297, %v1293
    %v1802 = vpack.c.b16 %v1298, %v1294
    %v1803 = vpack.c.b16 %v1303, %v1299
    %v1804 = vpack.c.b16 %v1304, %v1300
    %v1805 = vpack.c.b16 %v1305, %v1301
    %v1806 = vpack.c.b16 %v1306, %v1302
    %v1807 = vpack.c.b16 %v1311, %v1307
    %v1808 = vpack.c.b16 %v1312, %v1308
    %v1809 = vpack.c.b16 %v1313, %v1309
    %v1810 = vpack.c.b16 %v1314, %v1310
    %v1811 = vpack.c.b16 %v1319, %v1315
    %v1812 = vpack.c.b16 %v1320, %v1316
    %v1813 = vpack.c.b16 %v1321, %v1317
    %v1814 = vpack.c.b16 %v1322, %v1318
    %v1815 = vpack.c.b16 %v1327, %v1323
    %v1816 = vpack.c.b16 %v1328, %v1324
    %v1817 = vpack.c.b16 %v1329, %v1325
    %v1818 = vpack.c.b16 %v1330, %v1326
    %v1819 = vpack.c.b16 %v1335, %v1331
    %v1820 = vpack.c.b16 %v1336, %v1332
    %v1821 = vpack.c.b16 %v1337, %v1333
    %v1822 = vpack.c.b16 %v1338, %v1334
    %v1823 = vpack.c.b16 %v1343, %v1339
    %v1824 = vpack.c.b16 %v1344, %v1340
    %v1825 = vpack.c.b16 %v1345, %v1341
    %v1826 = vpack.c.b16 %v1346, %v1342
    %v1827 = vpack.c.b16 %v1351, %v1347
    %v1828 = vpack.c.b16 %v1352, %v1348
    %v1829 = vpack.c.b16 %v1353, %v1349
    %v1830 = vpack.c.b16 %v1354, %v1350
    %v1831 = vpack.c.b16 %v1359, %v1355
    %v1832 = vpack.c.b16 %v1360, %v1356
    %v1833 = vpack.c.b16 %v1361, %v1357
    %v1834 = vpack.c.b16 %v1362, %v1358
    %v1835 = vpack.c.b16 %v1367, %v1363
    %v1836 = vpack.c.b16 %v1368, %v1364
    %v1837 = vpack.c.b16 %v1369, %v1365
    %v1838 = vpack.c.b16 %v1370, %v1366
    %v1839 = vpack.c.b16 %v1375, %v1371
    %v1840 = vpack.c.b16 %v1376, %v1372
    %v1841 = vpack.c.b16 %v1377, %v1373
    %v1842 = vpack.c.b16 %v1378, %v1374
    %v1843 = vpack.c.b16 %v1383, %v1379
    %v1844 = vpack.c.b16 %v1384, %v1380
    %v1845 = vpack.c.b16 %v1385, %v1381
    %v1846 = vpack.c.b16 %v1386, %v1382
    %v1847 = vpack.c.b16 %v1391, %v1387
    %v1848 = vpack.c.b16 %v1392, %v1388
    %v1849 = vpack.c.b16 %v1393, %v1389
    %v1850 = vpack.c.b16 %v1394, %v1390
    %v1851 = vpack.c.b16 %v1399, %v1395
    %v1852 = vpack.c.b16 %v1400, %v1396
    %v1853 = vpack.c.b16 %v1401, %v1397
    %v1854 = vpack.c.b16 %v1402, %v1398
    %v1855 = vpack.c.b16 %v1407, %v1403
    %v1856 = vpack.c.b16 %v1408, %v1404
    %v1857 = vpack.c.b16 %v1409, %v1405
    %v1858 = vpack.c.b16 %v1410, %v1406
    %v1859 = vpack.c.b16 %v1415, %v1411
    %v1860 = vpack.c.b16 %v1416, %v1412
    %v1861 = vpack.c.b16 %v1417, %v1413
    %v1862 = vpack.c.b16 %v1418, %v1414
    %v1863 = vpack.c.b16 %v1423, %v1419
    %v1864 = vpack.c.b16 %v1424, %v1420
    %v1865 = vpack.c.b16 %v1425, %v1421
    %v1866 = vpack.c.b16 %v1426, %v1422
    %v1867 = vpack.c.b16 %v1431, %v1427
    %v1868 = vpack.c.b16 %v1432, %v1428
    %v1869 = vpack.c.b16 %v1433, %v1429
    %v1870 = vpack.c.b16 %v1434, %v1430
    %v1871 = vpack.c.b16 %v1439, %v1435
    %v1872 = vpack.c.b16 %v1440, %v1436
    %v1873 = vpack.c.b16 %v1441, %v1437
    %v1874 = vpack.c.b16 %v1442, %v1438
    %v1875 = vpack.c.b16 %v1447, %v1443
    %v1876 = vpack.c.b16 %v1448, %v1444
    %v1877 = vpack.c.b16 %v1449, %v1445
    %v1878 = vpack.c.b16 %v1450, %v1446
    %v1879 = vpack.c.b16 %v1455, %v1451
    %v1880 = vpack.c.b16 %v1456, %v1452
    %v1881 = vpack.c.b16 %v1457, %v1453
    %v1882 = vpack.c.b16 %v1458, %v1454
    %v1883 = vpack.c.b16 %v1463, %v1459
    %v1884 = vpack.c.b16 %v1464, %v1460
    %v1885 = vpack.c.b16 %v1465, %v1461
    %v1886 = vpack.c.b16 %v1466, %v1462
    %v1887 = vpack.c.b16 %v1471, %v1467
    %v1888 = vpack.c.b16 %v1472, %v1468
    %v1889 = vpack.c.b16 %v1473, %v1469
    %v1890 = vpack.c.b16 %v1474, %v1470
    %v1891 = vpack.c.b16 %v1479, %v1475
    %v1892 = vpack.c.b16 %v1480, %v1476
    %v1893 = vpack.c.b16 %v1481, %v1477
    %v1894 = vpack.c.b16 %v1482, %v1478
    %v1895 = vpack.c.b16 %v1487, %v1483
    %v1896 = vpack.c.b16 %v1488, %v1484
    %v1897 = vpack.c.b16 %v1489, %v1485
    %v1898 = vpack.c.b16 %v1490, %v1486
    %v1899 = vpack.c.b16 %v1495, %v1491
    %v1900 = vpack.c.b16 %v1496, %v1492
    %v1901 = vpack.c.b16 %v1497, %v1493
    %v1902 = vpack.c.b16 %v1498, %v1494
    %v1903 = vpack.c.b16 %v1503, %v1499
    %v1904 = vpack.c.b16 %v1504, %v1500
    %v1905 = vpack.c.b16 %v1505, %v1501
    %v1906 = vpack.c.b16 %v1506, %v1502
    %v1907 = vpack.c.b16 %v1511, %v1507
    %v1908 = vpack.c.b16 %v1512, %v1508
    %v1909 = vpack.c.b16 %v1513, %v1509
    %v1910 = vpack.c.b16 %v1514, %v1510
    %v1911 = vpack.c.b16 %v1519, %v1515
    %v1912 = vpack.c.b16 %v1520, %v1516
    %v1913 = vpack.c.b16 %v1521, %v1517
    %v1914 = vpack.c.b16 %v1522, %v1518
    %v1915 = vpack.c.b16 %v1527, %v1523
    %v1916 = vpack.c.b16 %v1528, %v1524
    %v1917 = vpack.c.b16 %v1529, %v1525
    %v1918 = vpack.c.b16 %v1530, %v1526
    %v1919 = vpack.c.b16 %v1535, %v1531
    %v1920 = vpack.c.b16 %v1536, %v1532
    %v1921 = vpack.c.b16 %v1537, %v1533
    %v1922 = vpack.c.b16 %v1538, %v1534
    %v1923 = vpack.c.b16 %v1543, %v1539
    %v1924 = vpack.c.b16 %v1544, %v1540
    %v1925 = vpack.c.b16 %v1545, %v1541
    %v1926 = vpack.c.b16 %v1546, %v1542
    %v1927 = vpack.c.b16 %v1551, %v1547
    %v1928 = vpack.c.b16 %v1552, %v1548
    %v1929 = vpack.c.b16 %v1553, %v1549
    %v1930 = vpack.c.b16 %v1554, %v1550
    %v1931 = vpack.c.b16 %v1559, %v1555
    %v1932 = vpack.c.b16 %v1560, %v1556
    %v1933 = vpack.c.b16 %v1561, %v1557
    %v1934 = vpack.c.b16 %v1562, %v1558
    %v1935 = vpack.c.b16 %v1567, %v1563
    %v1936 = vpack.c.b16 %v1568, %v1564
    %v1937 = vpack.c.b16 %v1569, %v1565
    %v1938 = vpack.c.b16 %v1570, %v1566
    %v1939 = vpack.c.b16 %v1575, %v1571
    %v1940 = vpack.c.b16 %v1576, %v1572
    %v1941 = vpack.c.b16 %v1577, %v1573
    %v1942 = vpack.c.b16 %v1578, %v1574
    %v1943 = vpack.c.b16 %v1583, %v1579
    %v1944 = vpack.c.b16 %v1584, %v1580
    %v1945 = vpack.c.b16 %v1585, %v1581
    %v1946 = vpack.c.b16 %v1586, %v1582
    %v1947 = vpack.c.b16 %v1591, %v1587
    %v1948 = vpack.c.b16 %v1592, %v1588
    %v1949 = vpack.c.b16 %v1593, %v1589
    %v1950 = vpack.c.b16 %v1594, %v1590
    %v1951 = vpack.c.b16 %v1599, %v1595
    %v1952 = vpack.c.b16 %v1600, %v1596
    %v1953 = vpack.c.b16 %v1601, %v1597
    %v1954 = vpack.c.b16 %v1602, %v1598
    %v1955 = vpack.c.b16 %v1607, %v1603
    %v1956 = vpack.c.b16 %v1608, %v1604
    %v1957 = vpack.c.b16 %v1609, %v1605
    %v1958 = vpack.c.b16 %v1610, %v1606
    %v1959 = vpack.c.b16 %v1615, %v1611
    %v1960 = vpack.c.b16 %v1616, %v1612
    %v1961 = vpack.c.b16 %v1617, %v1613
    %v1962 = vpack.c.b16 %v1618, %v1614
    %v1963 = vpack.c.b16 %v1623, %v1619
    %v1964 = vpack.c.b16 %v1624, %v1620
    %v1965 = vpack.c.b16 %v1625, %v1621
    %v1966 = vpack.c.b16 %v1626, %v1622
    %v1967 = vpack.c.b16 %v1631, %v1627
    %v1968 = vpack.c.b16 %v1632, %v1628
    %v1969 = vpack.c.b16 %v1633, %v1629
    %v1970 = vpack.c.b16 %v1634, %v1630
    %v1971 = vpack.c.b16 %v1639, %v1635
    %v1972 = vpack.c.b16 %v1640, %v1636
    %v1973 = vpack.c.b16 %v1641, %v1637
    %v1974 = vpack.c.b16 %v1642, %v1638
    %v1975 = vpack.c.b16 %v1647, %v1643
    %v1976 = vpack.c.b16 %v1648, %v1644
    %v1977 = vpack.c.b16 %v1649, %v1645
    %v1978 = vpack.c.b16 %v1650, %v1646
    %v1979 = vpack.c.b16 %v1655, %v1651
    %v1980 = vpack.c.b16 %v1656, %v1652
    %v1981 = vpack.c.b16 %v1657, %v1653
    %v1982 = vpack.c.b16 %v1658, %v1654
    %v1983 = vpack.c.b16 %v1663, %v1659
    %v1984 = vpack.c.b16 %v1664, %v1660
    %v1985 = vpack.c.b16 %v1665, %v1661
    %v1986 = vpack.c.b16 %v1666, %v1662
    %v1987 = vpack.c.b16 %v1671, %v1667
    %v1988 = vpack.c.b16 %v1672, %v1668
    %v1989 = vpack.c.b16 %v1673, %v1669
    %v1990 = vpack.c.b16 %v1674, %v1670
    %v1991 = vpack.c.b16 %v1679, %v1675
    %v1992 = vpack.c.b16 %v1680, %v1676
    %v1993 = vpack.c.b16 %v1681, %v1677
    %v1994 = vpack.c.b16 %v1682, %v1678
    %v1995 = vpack.c.b16 %v1687, %v1683
    %v1996 = vpack.c.b16 %v1688, %v1684
    %v1997 = vpack.c.b16 %v1689, %v1685
    %v1998 = vpack.c.b16 %v1690, %v1686
    %v1999 = vpack.c.b16 %v1695, %v1691
    %v2000 = vpack.c.b16 %v1696, %v1692
    %v2001 = vpack.c.b16 %v1697, %v1693
    %v2002 = vpack.c.b16 %v1698, %v1694
    %v2003 = vpack.c.b16 %v1703, %v1699
    %v2004 = vpack.c.b16 %v1704, %v1700
    %v2005 = vpack.c.b16 %v1705, %v1701
    %v2006 = vpack.c.b16 %v1706, %v1702
    %v2007 = vpack.c.b16 %v1711, %v1707
    %v2008 = vpack.c.b16 %v1712, %v1708
    %v2009 = vpack.c.b16 %v1713, %v1709
    %v2010 = vpack.c.b16 %v1714, %v1710
    %v2011 = vpack.c.b16 %v1719, %v1715
    %v2012 = vpack.c.b16 %v1720, %v1716
    %v2013 = vpack.c.b16 %v1721, %v1717
    %v2014 = vpack.c.b16 %v1722, %v1718
    %v2015 = vpack.c.b16 %v1727, %v1723
    %v2016 = vpack.c.b16 %v1728, %v1724
    %v2017 = vpack.c.b16 %v1729, %v1725
    %v2018 = vpack.c.b16 %v1730, %v1726
    %v2019 = vpack.c.b16 %v1735, %v1731
    %v2020 = vpack.c.b16 %v1736, %v1732
    %v2021 = vpack.c.b16 %v1737, %v1733
    %v2022 = vpack.c.b16 %v1738, %v1734
    %v2023 = vpack.c.b16 %v1743, %v1739
    %v2024 = vpack.c.b16 %v1744, %v1740
    %v2025 = vpack.c.b16 %v1745, %v1741
    %v2026 = vpack.c.b16 %v1746, %v1742
    %v2027 = vpack.c.b16 %v1751, %v1747
    %v2028 = vpack.c.b16 %v1752, %v1748
    %v2029 = vpack.c.b16 %v1753, %v1749
    %v2030 = vpack.c.b16 %v1754, %v1750
    %v2031 = vpack.c.b16 %v1759, %v1755
    %v2032 = vpack.c.b16 %v1760, %v1756
    %v2033 = vpack.c.b16 %v1761, %v1757
    %v2034 = vpack.c.b16 %v1762, %v1758
    %v2035 = vpack.c.b16 %v1767, %v1763
    %v2036 = vpack.c.b16 %v1768, %v1764
    %v2037 = vpack.c.b16 %v1769, %v1765
    %v2038 = vpack.c.b16 %v1770, %v1766
    %v2039 = vpack.c.b16 %v1775, %v1771
    %v2040 = vpack.c.b16 %v1776, %v1772
    %v2041 = vpack.c.b16 %v1777, %v1773
    %v2042 = vpack.c.b16 %v1778, %v1774
    %v2043 = vpack.c.b16 %v1783, %v1779
    %v2044 = vpack.c.b16 %v1784, %v1780
    %v2045 = vpack.c.b16 %v1785, %v1781
    %v2046 = vpack.c.b16 %v1786, %v1782
    %v2047 = vpack.c.b16 %v1791, %v1787
    %v2048 = vpack.c.b16 %v1792, %v1788
    %v2049 = vpack.c.b16 %v1793, %v1789
    %v2050 = vpack.c.b16 %v1794, %v1790
    %2307 = vmatprep.subr.bf16.mxu0 %v1796
    %2308 = vmatpush1.bf16.msra.mxu0 %v1795
    %2309 = vmatprep.subr.bf16.mxu0 %v1800
    %2310 = vmatpush1.bf16.msra.mxu0 %v1799
    %2311 = vmatprep.subr.bf16.mxu0 %v1804
    %2312 = vmatpush1.bf16.msra.mxu0 %v1803
    %2313 = vmatprep.subr.bf16.mxu0 %v1808
    %2314 = vmatpush1.bf16.msra.mxu0 %v1807
    %2315 = vmatprep.subr.bf16.mxu0 %v1812
    %2316 = vmatpush1.bf16.msra.mxu0 %v1811
    %2317 = vmatprep.subr.bf16.mxu0 %v1816
    %2318 = vmatpush1.bf16.msra.mxu0 %v1815
    %2319 = vmatprep.subr.bf16.mxu0 %v1820
    %2320 = vmatpush1.bf16.msra.mxu0 %v1819
    %2321 = vmatprep.subr.bf16.mxu0 %v1824
    %2322 = vmatpush1.bf16.msra.mxu0 %v1823
    %2323 = vmatprep.subr.bf16.mxu0 %v1828
    %2324 = vmatpush1.bf16.msra.mxu0 %v1827
    %2325 = vmatprep.subr.bf16.mxu0 %v1832
    %2326 = vmatpush1.bf16.msra.mxu0 %v1831
    %2327 = vmatprep.subr.bf16.mxu0 %v1836
    %2328 = vmatpush1.bf16.msra.mxu0 %v1835
    %2329 = vmatprep.subr.bf16.mxu0 %v1840
    %2330 = vmatpush1.bf16.msra.mxu0 %v1839
    %2331 = vmatprep.subr.bf16.mxu0 %v1844
    %2332 = vmatpush1.bf16.msra.mxu0 %v1843
    %2333 = vmatprep.subr.bf16.mxu0 %v1848
    %2334 = vmatpush1.bf16.msra.mxu0 %v1847
    %2335 = vmatprep.subr.bf16.mxu0 %v1852
    %2336 = vmatpush1.bf16.msra.mxu0 %v1851
    %2337 = vmatprep.subr.bf16.mxu0 %v1856
    %2338 = vmatpush1.bf16.msra.mxu0 %v1855
    %2339 = vmatprep.mubr.bf16.mxu0 %v734
    %2340 = vmatmul.mubr.bf16.gmra.mrb[0].mxu0 %v733
    %v2341 = vpop.f32.mrb[0].mxu0
    %v2342 = vadd.f32 %v1010, %v2341
    %v2343 = vpop.f32.mrb[0].mxu0
    %v2344 = vadd.f32 %v1014, %v2343
    %v2345 = vpop.f32.mrb[0].mxu0
    %v2346 = vpop.f32.mrb[0].mxu0
    %2347 = vdwg.mxu0
    %2348 = vmatprep.subr.bf16.mxu0 %v1860
    %2349 = vmatpush1.bf16.msra.mxu0 %v1859
    %2350 = vmatprep.subr.bf16.mxu0 %v1864
    %2351 = vmatpush1.bf16.msra.mxu0 %v1863
    %2352 = vmatprep.subr.bf16.mxu0 %v1868
    %2353 = vmatpush1.bf16.msra.mxu0 %v1867
    %2354 = vmatprep.subr.bf16.mxu0 %v1872
    %2355 = vmatpush1.bf16.msra.mxu0 %v1871
    %2356 = vmatprep.subr.bf16.mxu0 %v1876
    %2357 = vmatpush1.bf16.msra.mxu0 %v1875
    %2358 = vmatprep.subr.bf16.mxu0 %v1880
    %2359 = vmatpush1.bf16.msra.mxu0 %v1879
    %2360 = vmatprep.subr.bf16.mxu0 %v1884
    %2361 = vmatpush1.bf16.msra.mxu0 %v1883
    %2362 = vmatprep.subr.bf16.mxu0 %v1888
    %2363 = vmatpush1.bf16.msra.mxu0 %v1887
    %2364 = vmatprep.subr.bf16.mxu0 %v1892
    %2365 = vmatpush1.bf16.msra.mxu0 %v1891
    %2366 = vmatprep.subr.bf16.mxu0 %v1896
    %2367 = vmatpush1.bf16.msra.mxu0 %v1895
    %2368 = vmatprep.subr.bf16.mxu0 %v1900
    %2369 = vmatpush1.bf16.msra.mxu0 %v1899
    %2370 = vmatprep.subr.bf16.mxu0 %v1904
    %2371 = vmatpush1.bf16.msra.mxu0 %v1903
    %2372 = vmatprep.subr.bf16.mxu0 %v1908
    %2373 = vmatpush1.bf16.msra.mxu0 %v1907
    %2374 = vmatprep.subr.bf16.mxu0 %v1912
    %2375 = vmatpush1.bf16.msra.mxu0 %v1911
    %2376 = vmatprep.subr.bf16.mxu0 %v1916
    %2377 = vmatpush1.bf16.msra.mxu0 %v1915
    %2378 = vmatprep.subr.bf16.mxu0 %v1920
    %2379 = vmatpush1.bf16.msra.mxu0 %v1919
    %2380 = vmatprep.mubr.bf16.mxu0 %v740
    %2381 = vmatmul.mubr.bf16.gmra.mrb[0].mxu0 %v739
    %v2382 = vpop.f32.mrb[0].mxu0
    %v2383 = vadd.f32 %v2342, %v2382
    %v2384 = vpop.f32.mrb[0].mxu0
    %v2385 = vadd.f32 %v2344, %v2384
    %v2386 = vpop.f32.mrb[0].mxu0
    %v2387 = vpop.f32.mrb[0].mxu0
    %2388 = vdwg.mxu0
    %2389 = vmatprep.subr.bf16.mxu0 %v1924
    %2390 = vmatpush1.bf16.msra.mxu0 %v1923
    %2391 = vmatprep.subr.bf16.mxu0 %v1928
    %2392 = vmatpush1.bf16.msra.mxu0 %v1927
    %2393 = vmatprep.subr.bf16.mxu0 %v1932
    %2394 = vmatpush1.bf16.msra.mxu0 %v1931
    %2395 = vmatprep.subr.bf16.mxu0 %v1936
    %2396 = vmatpush1.bf16.msra.mxu0 %v1935
    %2397 = vmatprep.subr.bf16.mxu0 %v1940
    %2398 = vmatpush1.bf16.msra.mxu0 %v1939
    %2399 = vmatprep.subr.bf16.mxu0 %v1944
    %2400 = vmatpush1.bf16.msra.mxu0 %v1943
    %2401 = vmatprep.subr.bf16.mxu0 %v1948
    %2402 = vmatpush1.bf16.msra.mxu0 %v1947
    %2403 = vmatprep.subr.bf16.mxu0 %v1952
    %2404 = vmatpush1.bf16.msra.mxu0 %v1951
    %2405 = vmatprep.subr.bf16.mxu0 %v1956
    %2406 = vmatpush1.bf16.msra.mxu0 %v1955
    %2407 = vmatprep.subr.bf16.mxu0 %v1960
    %2408 = vmatpush1.bf16.msra.mxu0 %v1959
    %2409 = vmatprep.subr.bf16.mxu0 %v1964
    %2410 = vmatpush1.bf16.msra.mxu0 %v1963
    %2411 = vmatprep.subr.bf16.mxu0 %v1968
    %2412 = vmatpush1.bf16.msra.mxu0 %v1967
    %2413 = vmatprep.subr.bf16.mxu0 %v1972
    %2414 = vmatpush1.bf16.msra.mxu0 %v1971
    %2415 = vmatprep.subr.bf16.mxu0 %v1976
    %2416 = vmatpush1.bf16.msra.mxu0 %v1975
    %2417 = vmatprep.subr.bf16.mxu0 %v1980
    %2418 = vmatpush1.bf16.msra.mxu0 %v1979
    %2419 = vmatprep.subr.bf16.mxu0 %v1984
    %2420 = vmatpush1.bf16.msra.mxu0 %v1983
    %2421 = vmatprep.mubr.bf16.mxu0 %v736
    %2422 = vmatmul.mubr.bf16.gmra.mrb[0].mxu0 %v735
    %v2423 = vpop.f32.mrb[0].mxu0
    %v2424 = vadd.f32 %v2383, %v2423
    %v2425 = vpop.f32.mrb[0].mxu0
    %v2426 = vadd.f32 %v2385, %v2425
    %v2427 = vpop.f32.mrb[0].mxu0
    %v2428 = vpop.f32.mrb[0].mxu0
    %2429 = vdwg.mxu0
    %2430 = vmatprep.subr.bf16.mxu0 %v1988
    %2431 = vmatpush1.bf16.msra.mxu0 %v1987
    %2432 = vmatprep.subr.bf16.mxu0 %v1992
    %2433 = vmatpush1.bf16.msra.mxu0 %v1991
    %2434 = vmatprep.subr.bf16.mxu0 %v1996
    %2435 = vmatpush1.bf16.msra.mxu0 %v1995
    %2436 = vmatprep.subr.bf16.mxu0 %v2000
    %2437 = vmatpush1.bf16.msra.mxu0 %v1999
    %2438 = vmatprep.subr.bf16.mxu0 %v2004
    %2439 = vmatpush1.bf16.msra.mxu0 %v2003
    %2440 = vmatprep.subr.bf16.mxu0 %v2008
    %2441 = vmatpush1.bf16.msra.mxu0 %v2007
    %2442 = vmatprep.subr.bf16.mxu0 %v2012
    %2443 = vmatpush1.bf16.msra.mxu0 %v2011
    %2444 = vmatprep.subr.bf16.mxu0 %v2016
    %2445 = vmatpush1.bf16.msra.mxu0 %v2015
    %2446 = vmatprep.subr.bf16.mxu0 %v2020
    %2447 = vmatpush1.bf16.msra.mxu0 %v2019
    %2448 = vmatprep.subr.bf16.mxu0 %v2024
    %2449 = vmatpush1.bf16.msra.mxu0 %v2023
    %2450 = vmatprep.subr.bf16.mxu0 %v2028
    %2451 = vmatpush1.bf16.msra.mxu0 %v2027
    %2452 = vmatprep.subr.bf16.mxu0 %v2032
    %2453 = vmatpush1.bf16.msra.mxu0 %v2031
    %2454 = vmatprep.subr.bf16.mxu0 %v2036
    %2455 = vmatpush1.bf16.msra.mxu0 %v2035
    %2456 = vmatprep.subr.bf16.mxu0 %v2040
    %2457 = vmatpush1.bf16.msra.mxu0 %v2039
    %2458 = vmatprep.subr.bf16.mxu0 %v2044
    %2459 = vmatpush1.bf16.msra.mxu0 %v2043
    %2460 = vmatprep.subr.bf16.mxu0 %v2048
    %2461 = vmatpush1.bf16.msra.mxu0 %v2047
    %2462 = vmatprep.mubr.bf16.mxu0 %v746
    %2463 = vmatmul.mubr.bf16.gmra.mrb[0].mxu0 %v745
    %v2464 = vpop.f32.mrb[0].mxu0
    %v2465 = vadd.f32 %v2424, %v2464
    %v2466 = vpop.f32.mrb[0].mxu0
    %v2467 = vadd.f32 %v2426, %v2466
    %v2468 = vpop.f32.mrb[0].mxu0
    %v2469 = vpop.f32.mrb[0].mxu0
    %2470 = vdwg.mxu0
    %2471 = vmatprep.subr.bf16.mxu0 %v1798
    %2472 = vmatpush1.bf16.msra.mxu0 %v1797
    %2473 = vmatprep.subr.bf16.mxu0 %v1802
    %2474 = vmatpush1.bf16.msra.mxu0 %v1801
    %2475 = vmatprep.subr.bf16.mxu0 %v1806
    %2476 = vmatpush1.bf16.msra.mxu0 %v1805
    %2477 = vmatprep.subr.bf16.mxu0 %v1810
    %2478 = vmatpush1.bf16.msra.mxu0 %v1809
    %2479 = vmatprep.subr.bf16.mxu0 %v1814
    %2480 = vmatpush1.bf16.msra.mxu0 %v1813
    %2481 = vmatprep.subr.bf16.mxu0 %v1818
    %2482 = vmatpush1.bf16.msra.mxu0 %v1817
    %2483 = vmatprep.subr.bf16.mxu0 %v1822
    %2484 = vmatpush1.bf16.msra.mxu0 %v1821
    %2485 = vmatprep.subr.bf16.mxu0 %v1826
    %2486 = vmatpush1.bf16.msra.mxu0 %v1825
    %2487 = vmatprep.subr.bf16.mxu0 %v1830
    %2488 = vmatpush1.bf16.msra.mxu0 %v1829
    %2489 = vmatprep.subr.bf16.mxu0 %v1834
    %2490 = vmatpush1.bf16.msra.mxu0 %v1833
    %2491 = vmatprep.subr.bf16.mxu0 %v1838
    %2492 = vmatpush1.bf16.msra.mxu0 %v1837
    %2493 = vmatprep.subr.bf16.mxu0 %v1842
    %2494 = vmatpush1.bf16.msra.mxu0 %v1841
    %2495 = vmatprep.subr.bf16.mxu0 %v1846
    %2496 = vmatpush1.bf16.msra.mxu0 %v1845
    %2497 = vmatprep.subr.bf16.mxu0 %v1850
    %2498 = vmatpush1.bf16.msra.mxu0 %v1849
    %2499 = vmatprep.subr.bf16.mxu0 %v1854
    %2500 = vmatpush1.bf16.msra.mxu0 %v1853
    %2501 = vmatprep.subr.bf16.mxu0 %v1858
    %2502 = vmatpush1.bf16.msra.mxu0 %v1857
    %2503 = vmatprep.mubr.bf16.mxu0 %v734
    %2504 = vmatmul.mubr.bf16.gmra.mrb[0].mxu0 %v733
    %v2505 = vpop.f32.mrb[0].mxu0
    %v2506 = vadd.f32 %v1018, %v2505
    %v2507 = vpop.f32.mrb[0].mxu0
    %v2508 = vadd.f32 %v1022, %v2507
    %v2509 = vpop.f32.mrb[0].mxu0
    %v2510 = vpop.f32.mrb[0].mxu0
    %2511 = vdwg.mxu0
    %2512 = vmatprep.subr.bf16.mxu0 %v1862
    %2513 = vmatpush1.bf16.msra.mxu0 %v1861
    %2514 = vmatprep.subr.bf16.mxu0 %v1866
    %2515 = vmatpush1.bf16.msra.mxu0 %v1865
    %2516 = vmatprep.subr.bf16.mxu0 %v1870
    %2517 = vmatpush1.bf16.msra.mxu0 %v1869
    %2518 = vmatprep.subr.bf16.mxu0 %v1874
    %2519 = vmatpush1.bf16.msra.mxu0 %v1873
    %2520 = vmatprep.subr.bf16.mxu0 %v1878
    %2521 = vmatpush1.bf16.msra.mxu0 %v1877
    %2522 = vmatprep.subr.bf16.mxu0 %v1882
    %2523 = vmatpush1.bf16.msra.mxu0 %v1881
    %2524 = vmatprep.subr.bf16.mxu0 %v1886
    %2525 = vmatpush1.bf16.msra.mxu0 %v1885
    %2526 = vmatprep.subr.bf16.mxu0 %v1890
    %2527 = vmatpush1.bf16.msra.mxu0 %v1889
    %2528 = vmatprep.subr.bf16.mxu0 %v1894
    %2529 = vmatpush1.bf16.msra.mxu0 %v1893
    %2530 = vmatprep.subr.bf16.mxu0 %v1898
    %2531 = vmatpush1.bf16.msra.mxu0 %v1897
    %2532 = vmatprep.subr.bf16.mxu0 %v1902
    %2533 = vmatpush1.bf16.msra.mxu0 %v1901
    %2534 = vmatprep.subr.bf16.mxu0 %v1906
    %2535 = vmatpush1.bf16.msra.mxu0 %v1905
    %2536 = vmatprep.subr.bf16.mxu0 %v1910
    %2537 = vmatpush1.bf16.msra.mxu0 %v1909
    %2538 = vmatprep.subr.bf16.mxu0 %v1914
    %2539 = vmatpush1.bf16.msra.mxu0 %v1913
    %2540 = vmatprep.subr.bf16.mxu0 %v1918
    %2541 = vmatpush1.bf16.msra.mxu0 %v1917
    %2542 = vmatprep.subr.bf16.mxu0 %v1922
    %2543 = vmatpush1.bf16.msra.mxu0 %v1921
    %2544 = vmatprep.mubr.bf16.mxu0 %v740
    %2545 = vmatmul.mubr.bf16.gmra.mrb[0].mxu0 %v739
    %v2546 = vpop.f32.mrb[0].mxu0
    %v2547 = vadd.f32 %v2506, %v2546
    %v2548 = vpop.f32.mrb[0].mxu0
    %v2549 = vadd.f32 %v2508, %v2548
    %v2550 = vpop.f32.mrb[0].mxu0
    %v2551 = vpop.f32.mrb[0].mxu0
    %2552 = vdwg.mxu0
    %2553 = vmatprep.subr.bf16.mxu0 %v1926
    %2554 = vmatpush1.bf16.msra.mxu0 %v1925
    %2555 = vmatprep.subr.bf16.mxu0 %v1930
    %2556 = vmatpush1.bf16.msra.mxu0 %v1929
    %2557 = vmatprep.subr.bf16.mxu0 %v1934
    %2558 = vmatpush1.bf16.msra.mxu0 %v1933
    %2559 = vmatprep.subr.bf16.mxu0 %v1938
    %2560 = vmatpush1.bf16.msra.mxu0 %v1937
    %2561 = vmatprep.subr.bf16.mxu0 %v1942
    %2562 = vmatpush1.bf16.msra.mxu0 %v1941
    %2563 = vmatprep.subr.bf16.mxu0 %v1946
    %2564 = vmatpush1.bf16.msra.mxu0 %v1945
    %2565 = vmatprep.subr.bf16.mxu0 %v1950
    %2566 = vmatpush1.bf16.msra.mxu0 %v1949
    %2567 = vmatprep.subr.bf16.mxu0 %v1954
    %2568 = vmatpush1.bf16.msra.mxu0 %v1953
    %2569 = vmatprep.subr.bf16.mxu0 %v1958
    %2570 = vmatpush1.bf16.msra.mxu0 %v1957
    %2571 = vmatprep.subr.bf16.mxu0 %v1962
    %2572 = vmatpush1.bf16.msra.mxu0 %v1961
    %2573 = vmatprep.subr.bf16.mxu0 %v1966
    %2574 = vmatpush1.bf16.msra.mxu0 %v1965
    %2575 = vmatprep.subr.bf16.mxu0 %v1970
    %2576 = vmatpush1.bf16.msra.mxu0 %v1969
    %2577 = vmatprep.subr.bf16.mxu0 %v1974
    %2578 = vmatpush1.bf16.msra.mxu0 %v1973
    %2579 = vmatprep.subr.bf16.mxu0 %v1978
    %2580 = vmatpush1.bf16.msra.mxu0 %v1977
    %2581 = vmatprep.subr.bf16.mxu0 %v1982
    %2582 = vmatpush1.bf16.msra.mxu0 %v1981
    %2583 = vmatprep.subr.bf16.mxu0 %v1986
    %2584 = vmatpush1.bf16.msra.mxu0 %v1985
    %2585 = vmatprep.mubr.bf16.mxu0 %v736
    %2586 = vmatmul.mubr.bf16.gmra.mrb[0].mxu0 %v735
    %v2587 = vpop.f32.mrb[0].mxu0
    %v2588 = vadd.f32 %v2547, %v2587
    %v2589 = vpop.f32.mrb[0].mxu0
    %v2590 = vadd.f32 %v2549, %v2589
    %v2591 = vpop.f32.mrb[0].mxu0
    %v2592 = vpop.f32.mrb[0].mxu0
    %2593 = vdwg.mxu0
    %2594 = vmatprep.subr.bf16.mxu0 %v1990
    %2595 = vmatpush1.bf16.msra.mxu0 %v1989
    %2596 = vmatprep.subr.bf16.mxu0 %v1994
    %2597 = vmatpush1.bf16.msra.mxu0 %v1993
    %2598 = vmatprep.subr.bf16.mxu0 %v1998
    %2599 = vmatpush1.bf16.msra.mxu0 %v1997
    %2600 = vmatprep.subr.bf16.mxu0 %v2002
    %2601 = vmatpush1.bf16.msra.mxu0 %v2001
    %2602 = vmatprep.subr.bf16.mxu0 %v2006
    %2603 = vmatpush1.bf16.msra.mxu0 %v2005
    %2604 = vmatprep.subr.bf16.mxu0 %v2010
    %2605 = vmatpush1.bf16.msra.mxu0 %v2009
    %2606 = vmatprep.subr.bf16.mxu0 %v2014
    %2607 = vmatpush1.bf16.msra.mxu0 %v2013
    %2608 = vmatprep.subr.bf16.mxu0 %v2018
    %2609 = vmatpush1.bf16.msra.mxu0 %v2017
    %2610 = vmatprep.subr.bf16.mxu0 %v2022
    %2611 = vmatpush1.bf16.msra.mxu0 %v2021
    %2612 = vmatprep.subr.bf16.mxu0 %v2026
    %2613 = vmatpush1.bf16.msra.mxu0 %v2025
    %2614 = vmatprep.subr.bf16.mxu0 %v2030
    %2615 = vmatpush1.bf16.msra.mxu0 %v2029
    %2616 = vmatprep.subr.bf16.mxu0 %v2034
    %2617 = vmatpush1.bf16.msra.mxu0 %v2033
    %2618 = vmatprep.subr.bf16.mxu0 %v2038
    %2619 = vmatpush1.bf16.msra.mxu0 %v2037
    %2620 = vmatprep.subr.bf16.mxu0 %v2042
    %2621 = vmatpush1.bf16.msra.mxu0 %v2041
    %2622 = vmatprep.subr.bf16.mxu0 %v2046
    %2623 = vmatpush1.bf16.msra.mxu0 %v2045
    %2624 = vmatprep.subr.bf16.mxu0 %v2050
    %2625 = vmatpush1.bf16.msra.mxu0 %v2049
    %2626 = vmatprep.mubr.bf16.mxu0 %v746
    %2627 = vmatmul.mubr.bf16.gmra.mrb[0].mxu0 %v745
    %v2628 = vpop.f32.mrb[0].mxu0
    %v2629 = vadd.f32 %v2588, %v2628
    %v2630 = vpop.f32.mrb[0].mxu0
    %v2631 = vadd.f32 %v2590, %v2630
    %v2632 = vpop.f32.mrb[0].mxu0
    %v2633 = vpop.f32.mrb[0].mxu0
    %2634 = vdwg.mxu0
    %v2635 = vmax.f32 %v2465, 0.0
    %v2636 = vmax.f32 %v2467, 0.0
    %v2637 = vmax.f32 %v2629, 0.0
    %v2638 = vmax.f32 %v2631, 0.0
    %2639 = vst [vmem:[%s7] sm:$0xff] %v2635
    %2640 = vst [vmem:[%s7 + $0x8] sm:$0xff] %v2636
    %2641 = vst [vmem:[%s7 + $0x10] sm:$0xff] %v2637
    %2642 = vst [vmem:[%s7 + $0x18] sm:$0xff] %v2638
    // Predicated region
    $region34: #{cae_forward.1} parent=1 // pred_check
      _
    $region35: #{cae_forward.1} parent=1 // pred_check_branch
      %2644 = sbr.rel (0) target = $region37
    $region36: #{cae_forward.1} parent=1 // pred_region
      _
    $region37: #{cae_forward.1} parent=1 // pred_fallthru
      _
    // Predicated region
    $region38: #{cae_forward.1} parent=1 // pred_check
      _
    $region39: #{cae_forward.1} parent=1 // pred_check_branch
      %2646 = sbr.rel (0) target = $region41
    $region40: #{cae_forward.1} parent=1 // pred_region
      _
    $region41: #{cae_forward.1} parent=1 // pred_fallthru
      _
    %2647 = vsyncpa [#allocation3], 1

</llo_original>
